<compile_context>
chip_gen: v7x
topology: tpu7x:2x2x1
jax: 0.10.0
libtpu: 0.0.40
codegen_flags: <defaults>
</compile_context>

<pallas_src>
import functools

import jax
import jax.numpy as jnp
from jax.experimental import pallas as pl
from jax.experimental.pallas import tpu as pltpu

C = 30           # embedding / conv channel dim (fixed by the module)
CPAD = 32        # channel dim padded to a sublane multiple (8-aligned concat offsets)
NUM_LAYERS = 4   # conv, conv2, conv3, conv4


def _round_up(x: int, m: int) -> int:
    return (x + m - 1) // m * m


def token_char_kernel(ids_ref, w1_ref, w_ref, b_ref, out_ref, *,
                      word_len: int, tokens: int, vocab_pad: int, pad_value: int):
    """One token-tile of the encoder (everything lane-major over chars/tokens).

    ids_ref : (1, R)                 int32  char ids, lane index = w*TB + t
    w1_ref  : (CPAD, 3*V_pad)        f32    layer-1 taps with embedding folded in
    w_ref   : (3, CPAD, 3*CPAD)      f32    layers 2..4 fused taps [prev | center | next]
    b_ref   : (4, CPAD, 1)           f32    per-layer biases (channel column)
    out_ref : (CPAD, TB)             f32    per-token max-pooled features
    """
    W, TB, V = word_len, tokens, vocab_pad
    R = W * TB

    ids = ids_ref[...]                                            # (1, R) int32

    # ---- one-hot over the (8-padded) vocab; lanes stay dense ----
    vocab = jax.lax.broadcasted_iota(jnp.int32, (V, R), 0)
    one_hot = (vocab == ids).astype(jnp.float32)                  # (V, R)

    zero_v = jnp.zeros((V, TB), jnp.float32)
    zero_c = jnp.zeros((CPAD, TB), jnp.float32)

    def shift_prev(x, zero):
        # result[:, w*TB + t] = x[:, (w-1)*TB + t]; char 0 gets Conv1d's zero padding.
        if W == 1:
            return zero
        return jnp.concatenate([zero, x[:, :R - TB]], axis=1)

    def shift_next(x, zero):
        if W == 1:
            return zero
        return jnp.concatenate([x[:, TB:], zero], axis=1)

    # ---- layer 1: embedding folded into the taps; single K = 3*V_pad matmul ----
    oh_stack = jnp.concatenate(
        [shift_prev(one_hot, zero_v), one_hot, shift_next(one_hot, zero_v)], axis=0)
    h = jnp.maximum(
        jnp.dot(w1_ref[...], oh_stack, preferred_element_type=jnp.float32) + b_ref[0],
        0.0)                                                      # (CPAD, R)

    # ---- layers 2..4: single K = 3*CPAD fused-tap matmul each ----
    for layer in range(1, NUM_LAYERS):
        h_stack = jnp.concatenate(
            [shift_prev(h, zero_c), h, shift_next(h, zero_c)], axis=0)  # (3*CPAD, R)
        h = jnp.maximum(
            jnp.dot(w_ref[layer - 1], h_stack, preferred_element_type=jnp.float32)
            + b_ref[layer],
            0.0)

    # ---- masked_fill(pad chars, -inf) + adaptive max pool over the char axis ----
    h = jnp.where(ids == pad_value, -jnp.inf, h)                  # (1,R) mask broadcast
    pooled = h[:, 0:TB]                                           # W-1 lane-dense maxes
    for w in range(1, W):
        pooled = jnp.maximum(pooled, h[:, w * TB:(w + 1) * TB])
    out_ref[...] = pooled


def token_character_encoder(x_ids, emb_table, conv_ws, conv_bs, *,
                            character_pad_value: int = 0, token_tile: int = 1024):
    """x_ids: (N, S, W) int char ids -> (N, S, 30) f32.

    conv_ws[l]: (3, C_in, C_out) with conv_ws[l][k] == torch_conv.weight[:, :, k].T
    conv_bs[l]: (1, C_out)
    """
    N, S, W = x_ids.shape
    V, Cc = emb_table.shape
    assert Cc == C
    B = N * S

    # Tokens per tile: multiple of 128 (lane-dense output block + lane-aligned char
    # shifts), large enough to amortize per-step pipeline overhead, and capped so the
    # grid keeps >= 2 parallel steps when there is enough work (v7x has 2 TensorCores;
    # on single-TC v5e/v6e the extra step only costs ~0.35 us).
    token_tile = max(128, _round_up(token_tile, 128))
    TB = min(token_tile, _round_up(B, 128))
    if B > 128 and _round_up(B, TB) // TB < 2:
        TB = max(128, _round_up(_round_up(B, 128) // 2, 128))
    B_pad = _round_up(B, TB)
    n_tiles = B_pad // TB
    R = W * TB

    # ---- char ids: pad remainder tokens with all-pad words (sliced off later), then
    #      lay out char-major within each tile: flat lane = tile*(W*TB) + w*TB + t ----
    ids = x_ids.reshape(B, W).astype(jnp.int32)
    if B_pad != B:
        ids = jnp.concatenate(
            [ids, jnp.full((B_pad - B, W), character_pad_value, jnp.int32)], axis=0)
    ids_cm = ids.reshape(n_tiles, TB, W).transpose(0, 2, 1).reshape(1, B_pad * W)

    # ---- layer-1 weights with the embedding folded in: Wf[k] = w1[k]^T @ E^T ----
    V_pad = _round_up(V, 8)
    emb_t = emb_table.astype(jnp.float32).T                       # (C, V)
    hp = jax.lax.Precision.HIGHEST
    w1_blocks = []
    for k in range(3):
        blk = jnp.matmul(conv_ws[0][k].astype(jnp.float32).T, emb_t, precision=hp)
        blk = jnp.pad(blk, ((0, CPAD - C), (0, V_pad - V)))       # (CPAD, V_pad)
        w1_blocks.append(blk)
    w1 = jnp.concatenate(w1_blocks, axis=1)                       # (CPAD, 3*V_pad)

    # ---- layers 2..4: fused-tap weights (CPAD, 3*CPAD), taps ordered [prev|center|next] ----
    w_rest = []
    for l in range(1, NUM_LAYERS):
        blocks = [jnp.pad(conv_ws[l][k].astype(jnp.float32).T,
                          ((0, CPAD - C), (0, CPAD - C))) for k in range(3)]
        w_rest.append(jnp.concatenate(blocks, axis=1))
    w_rest = jnp.stack(w_rest)                                    # (3, CPAD, 3*CPAD)

    b_all = jnp.stack([jnp.pad(b.reshape(-1).astype(jnp.float32), (0, CPAD - C))
                       for b in conv_bs]).reshape(NUM_LAYERS, CPAD, 1)

    kernel = functools.partial(token_char_kernel, word_len=W, tokens=TB,
                               vocab_pad=V_pad, pad_value=character_pad_value)

    out = pl.pallas_call(
        kernel,
        out_shape=jax.ShapeDtypeStruct((CPAD, B_pad), jnp.float32),
        grid=(n_tiles,),
        in_specs=[
            pl.BlockSpec((1, R), lambda i: (0, i)),                        # char ids
            pl.BlockSpec((CPAD, 3 * V_pad), lambda i: (0, 0)),             # layer-1 weights
            pl.BlockSpec((NUM_LAYERS - 1, CPAD, 3 * CPAD), lambda i: (0, 0, 0)),  # layers 2..4
            pl.BlockSpec((NUM_LAYERS, CPAD, 1), lambda i: (0, 0, 0)),      # biases
        ],
        out_specs=pl.BlockSpec((CPAD, TB), lambda i: (0, i)),              # lane-dense output
        compiler_params=pltpu.CompilerParams(
            dimension_semantics=("parallel",),
            # v5e's default scoped VMEM (16 MiB) is too small at TB=1024; 32 MiB covers the
            # ~10 MiB peak with headroom and stays well under v7x's 64 MiB physical VMEM.
            vmem_limit_bytes=32 * 1024 * 1024,
        ),
    )(ids_cm, w1, w_rest, b_all)

    # Drop padded channels / padded remainder tokens, transpose back to token-major.
    return out[:C, :B].T.reshape(N, S, C)


def reference(x_ids, emb_table, conv_ws, conv_bs, character_pad_value=0):
    """Pure-JAX reference mirroring the PyTorch forward."""
    N, S, W = x_ids.shape
    flat = x_ids.reshape(N * S, W)
    h = emb_table[flat].astype(jnp.float32)                       # (B, W, C)
    for w, b in zip(conv_ws, conv_bs):
        hp = jnp.pad(h, ((0, 0), (1, 1), (0, 0)))
        y = (hp[:, :-2, :] @ w[0] + hp[:, 1:-1, :] @ w[1] + hp[:, 2:, :] @ w[2]
             + b.reshape(1, 1, -1))
        h = jnp.maximum(y, 0.0)
    pad = (flat == character_pad_value)[:, :, None]
    h = jnp.where(pad, -jnp.inf, h)
    return jnp.max(h, axis=1).reshape(N, S, -1)


if __name__ == "__main__":
    num_embeddings = 40

    key = jax.random.PRNGKey(0)
    k_emb, *k_w = jax.random.split(key, 1 + 2 * NUM_LAYERS)

    # Deterministic synthetic parameters (shapes from the module's __init__).
    emb_table = jax.random.normal(k_emb, (num_embeddings, C), dtype=jnp.float32)
    bound = 1.0 / jnp.sqrt(jnp.float32(C * 3))
    conv_ws = tuple(jax.random.uniform(k_w[2 * i], (3, C, C),
                                       minval=-bound, maxval=bound, dtype=jnp.float32)
                    for i in range(NUM_LAYERS))
    conv_bs = tuple(jax.random.uniform(k_w[2 * i + 1], (1, C),
                                       minval=-bound, maxval=bound, dtype=jnp.float32)
                    for i in range(NUM_LAYERS))

    def make_ids(k, N, S, W):
        k_ids, k_len = jax.random.split(k)
        ids = jax.random.randint(k_ids, (N, S, W), 1, num_embeddings, dtype=jnp.int32)
        lens = jax.random.randint(k_len, (N, S), 3, W + 1, dtype=jnp.int32)
        pos = jnp.arange(W, dtype=jnp.int32)
        return jnp.where(pos[None, None, :] < lens[..., None], ids, 0)

    # Three cases: evenly tiled, token-remainder padding, and a multi-grid-step tile.
    for case, (N, S, W) in enumerate(((2, 8, 8), (3, 7, 8), (6, 40, 8))):
        x_ids = make_ids(jax.random.fold_in(key, case), N, S, W)
        out = jax.block_until_ready(
            token_character_encoder(x_ids, emb_table, conv_ws, conv_bs))
        ref = reference(x_ids, emb_table, conv_ws, conv_bs)
        assert out.shape == (N, S, C)
        assert jnp.allclose(out, ref, atol=2e-4, rtol=2e-4), f"mismatch at {(N, S, W)}"

    print("KERNEL_OK")
</pallas_src>

<mosaic_0001>
module attributes {stable_mosaic.version = 11 : i64} {
  func.func @token_char_kernel(%arg0: i32, %arg1: memref<1x1024xi32, #tpu.memory_space<vmem>>, %arg2: memref<32x120xf32, #tpu.memory_space<vmem>>, %arg3: memref<3x32x96xf32, #tpu.memory_space<vmem>>, %arg4: memref<4x32x1xf32, #tpu.memory_space<vmem>>, %arg5: memref<32x128xf32, #tpu.memory_space<vmem>>) attributes {dimension_semantics = [#tpu.dimension_semantics<parallel>], iteration_bounds = array<i64: 1>, scalar_prefetch = 0 : i64, scratch_operands = 0 : i64, tpu.core_type = #tpu.core_type<tc>, window_params = [{transform_indices = @transform_0, window_bounds = array<i64: 1, 1024>}, {pipeline_mode = #tpu.pipeline_mode<synchronous>, transform_indices = @transform_1, window_bounds = array<i64: 32, 120>}, {pipeline_mode = #tpu.pipeline_mode<synchronous>, transform_indices = @transform_2, window_bounds = array<i64: 3, 32, 96>}, {pipeline_mode = #tpu.pipeline_mode<synchronous>, transform_indices = @transform_3, window_bounds = array<i64: 4, 32, 1>}, {transform_indices = @transform_4, window_bounds = array<i64: 32, 128>}]} {
    %c0 = arith.constant 0 : index
    %c0_0 = arith.constant 0 : index
    %0 = vector.load %arg1[%c0, %c0_0] : memref<1x1024xi32, #tpu.memory_space<vmem>>, vector<1x1024xi32>
    %1 = tpu.iota {dimensions = array<i32: 0>} : vector<40x1024xi32>
    %2 = vector.broadcast %0 : vector<1x1024xi32> to vector<40x1024xi32>
    %3 = arith.cmpi eq, %1, %2 : vector<40x1024xi32>
    %4 = arith.extui %3 : vector<40x1024xi1> to vector<40x1024xi32>
    %5 = arith.sitofp %4 : vector<40x1024xi32> to vector<40x1024xf32>
    %cst = arith.constant 0.000000e+00 : f32
    %6 = vector.broadcast %cst : f32 to vector<40x128xf32>
    %cst_1 = arith.constant 0.000000e+00 : f32
    %7 = vector.broadcast %cst_1 : f32 to vector<32x128xf32>
    %8 = vector.extract_strided_slice %5 {offsets = [0, 0], sizes = [40, 896], strides = [1, 1]} : vector<40x1024xf32> to vector<40x896xf32>
    %9 = tpu.concatenate %6, %8 in 1 : vector<40x128xf32>, vector<40x896xf32> -> vector<40x1024xf32>
    %10 = vector.extract_strided_slice %5 {offsets = [0, 128], sizes = [40, 896], strides = [1, 1]} : vector<40x1024xf32> to vector<40x896xf32>
    %11 = tpu.concatenate %10, %6 in 1 : vector<40x896xf32>, vector<40x128xf32> -> vector<40x1024xf32>
    %12 = tpu.concatenate %9, %5, %11 in 0 : vector<40x1024xf32>, vector<40x1024xf32>, vector<40x1024xf32> -> vector<120x1024xf32>
    %c0_2 = arith.constant 0 : index
    %c0_3 = arith.constant 0 : index
    %13 = vector.load %arg2[%c0_2, %c0_3] : memref<32x120xf32, #tpu.memory_space<vmem>>, vector<32x120xf32>
    %cst_4 = arith.constant dense<0.000000e+00> : vector<32x1024xf32>
    %14 = tpu.matmul %13, %12, %cst_4 {dimension_numbers = #tpu.dot_dimension_numbers<[1], [0], [0], [1], [0, 0, 1, 1], [], []>} : vector<32x120xf32>, vector<120x1024xf32>, vector<32x1024xf32> -> vector<32x1024xf32>
    %c0_5 = arith.constant 0 : index
    %c0_6 = arith.constant 0 : index
    %c0_7 = arith.constant 0 : index
    %15 = vector.load %arg4[%c0_5, %c0_6, %c0_7] : memref<4x32x1xf32, #tpu.memory_space<vmem>>, vector<1x32x1xf32>
    %16 = vector.shape_cast %15 : vector<1x32x1xf32> to vector<32x1xf32>
    %17 = vector.broadcast %16 : vector<32x1xf32> to vector<32x1024xf32>
    %18 = arith.addf %14, %17 : vector<32x1024xf32>
    %cst_8 = arith.constant 0.000000e+00 : f32
    %19 = vector.broadcast %cst_8 : f32 to vector<32x1024xf32>
    %20 = arith.maximumf %18, %19 : vector<32x1024xf32>
    %21 = vector.extract_strided_slice %20 {offsets = [0, 0], sizes = [32, 896], strides = [1, 1]} : vector<32x1024xf32> to vector<32x896xf32>
    %22 = tpu.concatenate %7, %21 in 1 : vector<32x128xf32>, vector<32x896xf32> -> vector<32x1024xf32>
    %23 = vector.extract_strided_slice %20 {offsets = [0, 128], sizes = [32, 896], strides = [1, 1]} : vector<32x1024xf32> to vector<32x896xf32>
    %24 = tpu.concatenate %23, %7 in 1 : vector<32x896xf32>, vector<32x128xf32> -> vector<32x1024xf32>
    %25 = tpu.concatenate %22, %20, %24 in 0 : vector<32x1024xf32>, vector<32x1024xf32>, vector<32x1024xf32> -> vector<96x1024xf32>
    %c0_9 = arith.constant 0 : index
    %c0_10 = arith.constant 0 : index
    %c0_11 = arith.constant 0 : index
    %26 = vector.load %arg3[%c0_9, %c0_10, %c0_11] : memref<3x32x96xf32, #tpu.memory_space<vmem>>, vector<1x32x96xf32>
    %27 = vector.shape_cast %26 : vector<1x32x96xf32> to vector<32x96xf32>
    %cst_12 = arith.constant dense<0.000000e+00> : vector<32x1024xf32>
    %28 = tpu.matmul %27, %25, %cst_12 {dimension_numbers = #tpu.dot_dimension_numbers<[1], [0], [0], [1], [0, 0, 1, 1], [], []>} : vector<32x96xf32>, vector<96x1024xf32>, vector<32x1024xf32> -> vector<32x1024xf32>
    %c1 = arith.constant 1 : index
    %c0_13 = arith.constant 0 : index
    %c0_14 = arith.constant 0 : index
    %29 = vector.load %arg4[%c1, %c0_13, %c0_14] : memref<4x32x1xf32, #tpu.memory_space<vmem>>, vector<1x32x1xf32>
    %30 = vector.shape_cast %29 : vector<1x32x1xf32> to vector<32x1xf32>
    %31 = vector.broadcast %30 : vector<32x1xf32> to vector<32x1024xf32>
    %32 = arith.addf %28, %31 : vector<32x1024xf32>
    %cst_15 = arith.constant 0.000000e+00 : f32
    %33 = vector.broadcast %cst_15 : f32 to vector<32x1024xf32>
    %34 = arith.maximumf %32, %33 : vector<32x1024xf32>
    %35 = vector.extract_strided_slice %34 {offsets = [0, 0], sizes = [32, 896], strides = [1, 1]} : vector<32x1024xf32> to vector<32x896xf32>
    %36 = tpu.concatenate %7, %35 in 1 : vector<32x128xf32>, vector<32x896xf32> -> vector<32x1024xf32>
    %37 = vector.extract_strided_slice %34 {offsets = [0, 128], sizes = [32, 896], strides = [1, 1]} : vector<32x1024xf32> to vector<32x896xf32>
    %38 = tpu.concatenate %37, %7 in 1 : vector<32x896xf32>, vector<32x128xf32> -> vector<32x1024xf32>
    %39 = tpu.concatenate %36, %34, %38 in 0 : vector<32x1024xf32>, vector<32x1024xf32>, vector<32x1024xf32> -> vector<96x1024xf32>
    %c1_16 = arith.constant 1 : index
    %c0_17 = arith.constant 0 : index
    %c0_18 = arith.constant 0 : index
    %40 = vector.load %arg3[%c1_16, %c0_17, %c0_18] : memref<3x32x96xf32, #tpu.memory_space<vmem>>, vector<1x32x96xf32>
    %41 = vector.shape_cast %40 : vector<1x32x96xf32> to vector<32x96xf32>
    %cst_19 = arith.constant dense<0.000000e+00> : vector<32x1024xf32>
    %42 = tpu.matmul %41, %39, %cst_19 {dimension_numbers = #tpu.dot_dimension_numbers<[1], [0], [0], [1], [0, 0, 1, 1], [], []>} : vector<32x96xf32>, vector<96x1024xf32>, vector<32x1024xf32> -> vector<32x1024xf32>
    %c2 = arith.constant 2 : index
    %c0_20 = arith.constant 0 : index
    %c0_21 = arith.constant 0 : index
    %43 = vector.load %arg4[%c2, %c0_20, %c0_21] : memref<4x32x1xf32, #tpu.memory_space<vmem>>, vector<1x32x1xf32>
    %44 = vector.shape_cast %43 : vector<1x32x1xf32> to vector<32x1xf32>
    %45 = vector.broadcast %44 : vector<32x1xf32> to vector<32x1024xf32>
    %46 = arith.addf %42, %45 : vector<32x1024xf32>
    %cst_22 = arith.constant 0.000000e+00 : f32
    %47 = vector.broadcast %cst_22 : f32 to vector<32x1024xf32>
    %48 = arith.maximumf %46, %47 : vector<32x1024xf32>
    %49 = vector.extract_strided_slice %48 {offsets = [0, 0], sizes = [32, 896], strides = [1, 1]} : vector<32x1024xf32> to vector<32x896xf32>
    %50 = tpu.concatenate %7, %49 in 1 : vector<32x128xf32>, vector<32x896xf32> -> vector<32x1024xf32>
    %51 = vector.extract_strided_slice %48 {offsets = [0, 128], sizes = [32, 896], strides = [1, 1]} : vector<32x1024xf32> to vector<32x896xf32>
    %52 = tpu.concatenate %51, %7 in 1 : vector<32x896xf32>, vector<32x128xf32> -> vector<32x1024xf32>
    %53 = tpu.concatenate %50, %48, %52 in 0 : vector<32x1024xf32>, vector<32x1024xf32>, vector<32x1024xf32> -> vector<96x1024xf32>
    %c2_23 = arith.constant 2 : index
    %c0_24 = arith.constant 0 : index
    %c0_25 = arith.constant 0 : index
    %54 = vector.load %arg3[%c2_23, %c0_24, %c0_25] : memref<3x32x96xf32, #tpu.memory_space<vmem>>, vector<1x32x96xf32>
    %55 = vector.shape_cast %54 : vector<1x32x96xf32> to vector<32x96xf32>
    %cst_26 = arith.constant dense<0.000000e+00> : vector<32x1024xf32>
    %56 = tpu.matmul %55, %53, %cst_26 {dimension_numbers = #tpu.dot_dimension_numbers<[1], [0], [0], [1], [0, 0, 1, 1], [], []>} : vector<32x96xf32>, vector<96x1024xf32>, vector<32x1024xf32> -> vector<32x1024xf32>
    %c3 = arith.constant 3 : index
    %c0_27 = arith.constant 0 : index
    %c0_28 = arith.constant 0 : index
    %57 = vector.load %arg4[%c3, %c0_27, %c0_28] : memref<4x32x1xf32, #tpu.memory_space<vmem>>, vector<1x32x1xf32>
    %58 = vector.shape_cast %57 : vector<1x32x1xf32> to vector<32x1xf32>
    %59 = vector.broadcast %58 : vector<32x1xf32> to vector<32x1024xf32>
    %60 = arith.addf %56, %59 : vector<32x1024xf32>
    %cst_29 = arith.constant 0.000000e+00 : f32
    %61 = vector.broadcast %cst_29 : f32 to vector<32x1024xf32>
    %62 = arith.maximumf %60, %61 : vector<32x1024xf32>
    %c0_i32 = arith.constant 0 : i32
    %63 = vector.broadcast %c0_i32 : i32 to vector<1x1024xi32>
    %64 = arith.cmpi eq, %0, %63 : vector<1x1024xi32>
    %cst_30 = arith.constant 0xFF800000 : f32
    %65 = vector.shape_cast %64 : vector<1x1024xi1> to vector<1x1024xi1>
    %66 = vector.broadcast %65 : vector<1x1024xi1> to vector<32x1024xi1>
    %67 = vector.broadcast %cst_30 : f32 to vector<32x1024xf32>
    %68 = arith.select %66, %67, %62 : vector<32x1024xi1>, vector<32x1024xf32>
    %69 = vector.extract_strided_slice %68 {offsets = [0, 0], sizes = [32, 128], strides = [1, 1]} : vector<32x1024xf32> to vector<32x128xf32>
    %70 = vector.extract_strided_slice %68 {offsets = [0, 128], sizes = [32, 128], strides = [1, 1]} : vector<32x1024xf32> to vector<32x128xf32>
    %71 = arith.maximumf %69, %70 : vector<32x128xf32>
    %72 = vector.extract_strided_slice %68 {offsets = [0, 256], sizes = [32, 128], strides = [1, 1]} : vector<32x1024xf32> to vector<32x128xf32>
    %73 = arith.maximumf %71, %72 : vector<32x128xf32>
    %74 = vector.extract_strided_slice %68 {offsets = [0, 384], sizes = [32, 128], strides = [1, 1]} : vector<32x1024xf32> to vector<32x128xf32>
    %75 = arith.maximumf %73, %74 : vector<32x128xf32>
    %76 = vector.extract_strided_slice %68 {offsets = [0, 512], sizes = [32, 128], strides = [1, 1]} : vector<32x1024xf32> to vector<32x128xf32>
    %77 = arith.maximumf %75, %76 : vector<32x128xf32>
    %78 = vector.extract_strided_slice %68 {offsets = [0, 640], sizes = [32, 128], strides = [1, 1]} : vector<32x1024xf32> to vector<32x128xf32>
    %79 = arith.maximumf %77, %78 : vector<32x128xf32>
    %80 = vector.extract_strided_slice %68 {offsets = [0, 768], sizes = [32, 128], strides = [1, 1]} : vector<32x1024xf32> to vector<32x128xf32>
    %81 = arith.maximumf %79, %80 : vector<32x128xf32>
    %82 = vector.extract_strided_slice %68 {offsets = [0, 896], sizes = [32, 128], strides = [1, 1]} : vector<32x1024xf32> to vector<32x128xf32>
    %83 = arith.maximumf %81, %82 : vector<32x128xf32>
    %c0_31 = arith.constant 0 : index
    %c0_32 = arith.constant 0 : index
    %84 = vector.load %arg5[%c0_31, %c0_32] : memref<32x128xf32, #tpu.memory_space<vmem>>, vector<32x128xf32>
    tpu.vector_store %arg5[%c0_31, %c0_32], %83 {strides = array<i32>} : memref<32x128xf32, #tpu.memory_space<vmem>>, vector<32x128xf32>,
    return
  }
  func.func @transform_0(%arg0: i32) -> (i32, i32) {
    %c0_i32 = arith.constant 0 : i32
    %c0_i32_0 = arith.constant 0 : i32
    return %c0_i32, %arg0 : i32, i32
  }
  func.func @transform_1(%arg0: i32) -> (i32, i32) {
    %c0_i32 = arith.constant 0 : i32
    %c0_i32_0 = arith.constant 0 : i32
    %c0_i32_1 = arith.constant 0 : i32
    return %c0_i32, %c0_i32_0 : i32, i32
  }
  func.func @transform_2(%arg0: i32) -> (i32, i32, i32) {
    %c0_i32 = arith.constant 0 : i32
    %c0_i32_0 = arith.constant 0 : i32
    %c0_i32_1 = arith.constant 0 : i32
    %c0_i32_2 = arith.constant 0 : i32
    return %c0_i32, %c0_i32_0, %c0_i32_1 : i32, i32, i32
  }
  func.func @transform_3(%arg0: i32) -> (i32, i32, i32) {
    %c0_i32 = arith.constant 0 : i32
    %c0_i32_0 = arith.constant 0 : i32
    %c0_i32_1 = arith.constant 0 : i32
    %c0_i32_2 = arith.constant 0 : i32
    return %c0_i32, %c0_i32_0, %c0_i32_1 : i32, i32, i32
  }
  func.func @transform_4(%arg0: i32) -> (i32, i32) {
    %c0_i32 = arith.constant 0 : i32
    %c0_i32_0 = arith.constant 0 : i32
    return %c0_i32, %arg0 : i32, i32
  }
}

</mosaic_0001>

<llo_original>
// kernel: tpu_custom_call.1
$region0: #{tpu_custom_call.1}
  #allocation0 [shape = 'u32[]', space=smem, size = 0x4, offset = 0x4, fixed_abs, tag = 'smem constant byte address 0x4 - core index']
  #allocation1 [shape = 'u32[144,128]{1,0:T(1,128)}', space=vmem, size = 0x12000, scoped, tag = 'internal scratch']
  %s0 = inlined_call_operand.vmem [shape: s32[1,1024], index: 0, kind: input, shape index: {}]
  %s1 = inlined_call_operand.vmem [shape: f32[32,120], index: 1, kind: input, shape index: {}]
  %s2 = inlined_call_operand.vmem [shape: f32[3,32,96], index: 2, kind: input, shape index: {}]
  %s3 = inlined_call_operand.vmem [shape: f32[4,32,1], index: 3, kind: input, shape index: {}]
  %s4 = inlined_call_operand.hbm [shape: f32[32,128], index: 4, kind: output, shape index: {}]
  %s5 = sld [smem:[#allocation0]]
  $region26: #{tpu_custom_call.1} parent=0
    _
  %s7 = ssub.s32 1, %s5
  %s8 = scalar_select 0, %s7, %s5
  $region1: #{tpu_custom_call.1} parent=0
    #allocation2 [shape = 'u8[16384]{0}', space=vmem, size = 0x4000, scoped, tag = 'output window, operand 0, single buffered']
    #allocation3 [shape = 's32[1]{0}', space=sflag, size = 0x4, scoped, tag = 'scoped memory for tpu_custom_call.1']
    %9 = vsyncpa [#allocation3], 0
    // Predicated region
    $region2: #{tpu_custom_call.1} parent=1 // pred_check
      _
    $region3: #{tpu_custom_call.1} parent=1 // pred_check_branch
      %11 = sbr.rel (0) target = $region5
    $region4: #{tpu_custom_call.1} parent=1 // pred_region
      _
    $region5: #{tpu_custom_call.1} parent=1 // pred_fallthru
      _
    // Predicated region
    $region6: #{tpu_custom_call.1} parent=1 // pred_check
      _
    $region7: #{tpu_custom_call.1} parent=1 // pred_check_branch
      %13 = sbr.rel (0) target = $region9
    $region8: #{tpu_custom_call.1} parent=1 // pred_region
      _
    $region9: #{tpu_custom_call.1} parent=1 // pred_fallthru
      _
    // Predicated region
    $region10: #{tpu_custom_call.1} parent=1 // pred_check
      _
    $region11: #{tpu_custom_call.1} parent=1 // pred_check_branch
      %15 = sbr.rel (0) target = $region13
    $region12: #{tpu_custom_call.1} parent=1 // pred_region
      _
    $region13: #{tpu_custom_call.1} parent=1 // pred_fallthru
      _
    // Predicated region
    $region14: #{tpu_custom_call.1} parent=1 // pred_check
      _
    $region15: #{tpu_custom_call.1} parent=1 // pred_check_branch
      %17 = sbr.rel (0) target = $region17
    $region16: #{tpu_custom_call.1} parent=1 // pred_region
      _
    $region17: #{tpu_custom_call.1} parent=1 // pred_fallthru
      _
    %v18 = vld [vmem:[%s0] sm:$0xff]
    %v19 = vlaneseq
    %v20 = vshrl.u32 %v19, 7
    %v21 = vadd.s32 %v20, 8
    %v22 = vadd.s32 %v20, 16
    %v23 = vadd.s32 %v20, 24
    %v24 = vadd.s32 %v20, 32
    %v25 = vlaneseq
    %v26 = vshrl.u32 %v25, 7
    %v27 = vsub.s32 0, %v26
    %v28 = vrot.slane %v18, %v27
    %v29 = vlaneseq
    %v30 = vshrl.u32 %v29, 7
    %v31 = vsub.s32 1, %v30
    %v32 = vrot.slane %v18, %v31
    %v33 = vlaneseq
    %v34 = vshrl.u32 %v33, 7
    %v35 = vsub.s32 2, %v34
    %v36 = vrot.slane %v18, %v35
    %v37 = vlaneseq
    %v38 = vshrl.u32 %v37, 7
    %v39 = vsub.s32 3, %v38
    %v40 = vrot.slane %v18, %v39
    %v41 = vlaneseq
    %v42 = vshrl.u32 %v41, 7
    %v43 = vsub.s32 4, %v42
    %v44 = vrot.slane %v18, %v43
    %v45 = vlaneseq
    %v46 = vshrl.u32 %v45, 7
    %v47 = vsub.s32 5, %v46
    %v48 = vrot.slane %v18, %v47
    %v49 = vlaneseq
    %v50 = vshrl.u32 %v49, 7
    %v51 = vsub.s32 6, %v50
    %v52 = vrot.slane %v18, %v51
    %v53 = vlaneseq
    %v54 = vshrl.u32 %v53, 7
    %v55 = vsub.s32 7, %v54
    %v56 = vrot.slane %v18, %v55
    %vm57 = vcmp.eq.s32.totalorder %v20, %v28
    %vm58 = vcmp.eq.s32.totalorder %v20, %v32
    %vm59 = vcmp.eq.s32.totalorder %v20, %v36
    %vm60 = vcmp.eq.s32.totalorder %v20, %v40
    %vm61 = vcmp.eq.s32.totalorder %v20, %v44
    %vm62 = vcmp.eq.s32.totalorder %v20, %v48
    %vm63 = vcmp.eq.s32.totalorder %v20, %v52
    %vm64 = vcmp.eq.s32.totalorder %v20, %v56
    %vm65 = vcmp.eq.s32.totalorder %v21, %v28
    %vm66 = vcmp.eq.s32.totalorder %v21, %v32
    %vm67 = vcmp.eq.s32.totalorder %v21, %v36
    %vm68 = vcmp.eq.s32.totalorder %v21, %v40
    %vm69 = vcmp.eq.s32.totalorder %v21, %v44
    %vm70 = vcmp.eq.s32.totalorder %v21, %v48
    %vm71 = vcmp.eq.s32.totalorder %v21, %v52
    %vm72 = vcmp.eq.s32.totalorder %v21, %v56
    %vm73 = vcmp.eq.s32.totalorder %v22, %v28
    %vm74 = vcmp.eq.s32.totalorder %v22, %v32
    %vm75 = vcmp.eq.s32.totalorder %v22, %v36
    %vm76 = vcmp.eq.s32.totalorder %v22, %v40
    %vm77 = vcmp.eq.s32.totalorder %v22, %v44
    %vm78 = vcmp.eq.s32.totalorder %v22, %v48
    %vm79 = vcmp.eq.s32.totalorder %v22, %v52
    %vm80 = vcmp.eq.s32.totalorder %v22, %v56
    %vm81 = vcmp.eq.s32.totalorder %v23, %v28
    %vm82 = vcmp.eq.s32.totalorder %v23, %v32
    %vm83 = vcmp.eq.s32.totalorder %v23, %v36
    %vm84 = vcmp.eq.s32.totalorder %v23, %v40
    %vm85 = vcmp.eq.s32.totalorder %v23, %v44
    %vm86 = vcmp.eq.s32.totalorder %v23, %v48
    %vm87 = vcmp.eq.s32.totalorder %v23, %v52
    %vm88 = vcmp.eq.s32.totalorder %v23, %v56
    %vm89 = vcmp.eq.s32.totalorder %v24, %v28
    %vm90 = vcmp.eq.s32.totalorder %v24, %v32
    %vm91 = vcmp.eq.s32.totalorder %v24, %v36
    %vm92 = vcmp.eq.s32.totalorder %v24, %v40
    %vm93 = vcmp.eq.s32.totalorder %v24, %v44
    %vm94 = vcmp.eq.s32.totalorder %v24, %v48
    %vm95 = vcmp.eq.s32.totalorder %v24, %v52
    %vm96 = vcmp.eq.s32.totalorder %v24, %v56
    %v97 = vsel %vm57, 1, 0
    %v98 = vsel %vm58, 1, 0
    %v99 = vsel %vm59, 1, 0
    %v100 = vsel %vm60, 1, 0
    %v101 = vsel %vm61, 1, 0
    %v102 = vsel %vm62, 1, 0
    %v103 = vsel %vm63, 1, 0
    %v104 = vsel %vm64, 1, 0
    %v105 = vsel %vm65, 1, 0
    %v106 = vsel %vm66, 1, 0
    %v107 = vsel %vm67, 1, 0
    %v108 = vsel %vm68, 1, 0
    %v109 = vsel %vm69, 1, 0
    %v110 = vsel %vm70, 1, 0
    %v111 = vsel %vm71, 1, 0
    %v112 = vsel %vm72, 1, 0
    %v113 = vsel %vm73, 1, 0
    %v114 = vsel %vm74, 1, 0
    %v115 = vsel %vm75, 1, 0
    %v116 = vsel %vm76, 1, 0
    %v117 = vsel %vm77, 1, 0
    %v118 = vsel %vm78, 1, 0
    %v119 = vsel %vm79, 1, 0
    %v120 = vsel %vm80, 1, 0
    %v121 = vsel %vm81, 1, 0
    %v122 = vsel %vm82, 1, 0
    %v123 = vsel %vm83, 1, 0
    %v124 = vsel %vm84, 1, 0
    %v125 = vsel %vm85, 1, 0
    %v126 = vsel %vm86, 1, 0
    %v127 = vsel %vm87, 1, 0
    %v128 = vsel %vm88, 1, 0
    %v129 = vsel %vm89, 1, 0
    %v130 = vsel %vm90, 1, 0
    %v131 = vsel %vm91, 1, 0
    %v132 = vsel %vm92, 1, 0
    %v133 = vsel %vm93, 1, 0
    %v134 = vsel %vm94, 1, 0
    %v135 = vsel %vm95, 1, 0
    %v136 = vsel %vm96, 1, 0
    %v137 = vcvt.s32.f32 %v97
    %v138 = vcvt.s32.f32 %v98
    %v139 = vcvt.s32.f32 %v99
    %v140 = vcvt.s32.f32 %v100
    %v141 = vcvt.s32.f32 %v101
    %v142 = vcvt.s32.f32 %v102
    %v143 = vcvt.s32.f32 %v103
    %v144 = vcvt.s32.f32 %v104
    %v145 = vcvt.s32.f32 %v105
    %v146 = vcvt.s32.f32 %v106
    %v147 = vcvt.s32.f32 %v107
    %v148 = vcvt.s32.f32 %v108
    %v149 = vcvt.s32.f32 %v109
    %v150 = vcvt.s32.f32 %v110
    %v151 = vcvt.s32.f32 %v111
    %v152 = vcvt.s32.f32 %v112
    %v153 = vcvt.s32.f32 %v113
    %v154 = vcvt.s32.f32 %v114
    %v155 = vcvt.s32.f32 %v115
    %v156 = vcvt.s32.f32 %v116
    %v157 = vcvt.s32.f32 %v117
    %v158 = vcvt.s32.f32 %v118
    %v159 = vcvt.s32.f32 %v119
    %v160 = vcvt.s32.f32 %v120
    %v161 = vcvt.s32.f32 %v121
    %v162 = vcvt.s32.f32 %v122
    %v163 = vcvt.s32.f32 %v123
    %v164 = vcvt.s32.f32 %v124
    %v165 = vcvt.s32.f32 %v125
    %v166 = vcvt.s32.f32 %v126
    %v167 = vcvt.s32.f32 %v127
    %v168 = vcvt.s32.f32 %v128
    %v169 = vcvt.s32.f32 %v129
    %v170 = vcvt.s32.f32 %v130
    %v171 = vcvt.s32.f32 %v131
    %v172 = vcvt.s32.f32 %v132
    %v173 = vcvt.s32.f32 %v133
    %v174 = vcvt.s32.f32 %v134
    %v175 = vcvt.s32.f32 %v135
    %v176 = vcvt.s32.f32 %v136
    %v177 = vld [vmem:[%s1] sm:$0xff]
    %v178 = vld [vmem:[%s1 + $0x8] sm:$0xff]
    %v179 = vld [vmem:[%s1 + $0x10] sm:$0xff]
    %v180 = vld [vmem:[%s1 + $0x18] sm:$0xff]
    %v181 = vld [vmem:[%s3] sm:$0xff]
    %v182 = vld [vmem:[%s3 + $0x8] sm:$0xff]
    %v183 = vld [vmem:[%s3 + $0x10] sm:$0xff]
    %v184 = vld [vmem:[%s3 + $0x18] sm:$0xff]
    %186 = vset.pattern.permute.xlu0 0
    %187 = vperm.xlu0 %186, %v181
    %v188 = vpop.permute.xlu0 %187
    %191 = vset.pattern.permute.xlu0 0
    %192 = vperm.xlu0 %191, %v182
    %v193 = vpop.permute.xlu0 %192
    %196 = vset.pattern.permute.xlu0 0
    %197 = vperm.xlu0 %196, %v183
    %v198 = vpop.permute.xlu0 %197
    %201 = vset.pattern.permute.xlu0 0
    %202 = vperm.xlu0 %201, %v184
    %v203 = vpop.permute.xlu0 %202
    %vm205 = vcmask 982016
    %v207 = vsel %vm205, %v177, 0
    %v210 = vsel %vm205, %v178, 0
    %v213 = vsel %vm205, %v179, 0
    %v216 = vsel %vm205, %v180, 0
    %218 = vmatprep.subr.mxu0 %v137
    %219 = vmatpush1.msra.mxu0 0.0
    %220 = vmatprep.subr.mxu0 %v145
    %221 = vmatpush1.msra.mxu0 0.0
    %222 = vmatprep.subr.mxu0 %v153
    %223 = vmatpush1.msra.mxu0 0.0
    %224 = vmatprep.subr.mxu0 %v161
    %225 = vmatpush1.msra.mxu0 0.0
    %226 = vmatprep.subr.mxu0 %v169
    %227 = vmatpush1.msra.mxu0 0.0
    %228 = vmatprep.subr.mxu0 %v138
    %229 = vmatpush1.msra.mxu0 %v137
    %230 = vmatprep.subr.mxu0 %v146
    %231 = vmatpush1.msra.mxu0 %v145
    %232 = vmatprep.subr.mxu0 %v154
    %233 = vmatpush1.msra.mxu0 %v153
    %234 = vmatprep.subr.mxu0 %v162
    %235 = vmatpush1.msra.mxu0 %v161
    %236 = vmatprep.subr.mxu0 %v170
    %237 = vmatpush1.msra.mxu0 %v169
    %238 = vmatprep.subr.mxu0 %v139
    %239 = vmatpush1.msra.mxu0 %v138
    %240 = vmatprep.subr.mxu0 %v147
    %241 = vmatpush1.msra.mxu0 %v146
    %242 = vmatprep.subr.mxu0 %v155
    %243 = vmatpush1.msra.mxu0 %v154
    %244 = vmatprep.subr.mxu0 %v163
    %245 = vmatpush1.msra.mxu0 %v162
    %246 = vmatprep.subr.mxu0 %v171
    %247 = vmatpush1.msra.mxu0 %v170
    %248 = vmatprep.subr.mxu0 0.0
    %249 = vmatpush1.msra.mxu0 0.0
    %250 = vmatprep.subr.mxu0 0.0
    %251 = vmatpush1.msra.mxu0 0.0
    %252 = vmatprep.subr.mxu0 0.0
    %253 = vmatpush1.msra.mxu0 0.0
    %254 = vmatprep.subr.mxu0 0.0
    %255 = vmatpush1.msra.mxu0 0.0
    %256 = vmatprep.subr.mxu0 0.0
    %257 = vmatpush1.msra.mxu0 0.0
    %258 = vmatprep.subr.mxu0 0.0
    %259 = vmatpush1.msra.mxu0 0.0
    %260 = vmatprep.subr.mxu0 0.0
    %261 = vmatpush1.msra.mxu0 0.0
    %262 = vmatprep.subr.mxu0 0.0
    %263 = vmatpush1.msra.mxu0 0.0
    %264 = vmatprep.subr.mxu0 0.0
    %265 = vmatpush1.msra.mxu0 0.0
    %266 = vmatprep.subr.mxu0 0.0
    %267 = vmatpush1.msra.mxu0 0.0
    %268 = vmatprep.subr.mxu0 0.0
    %269 = vmatpush1.msra.mxu0 0.0
    %270 = vmatprep.subr.mxu0 0.0
    %271 = vmatpush1.msra.mxu0 0.0
    %272 = vmatprep.subr.mxu0 0.0
    %273 = vmatpush1.msra.mxu0 0.0
    %274 = vmatprep.subr.mxu0 0.0
    %275 = vmatpush1.msra.mxu0 0.0
    %276 = vmatprep.subr.mxu0 0.0
    %277 = vmatpush1.msra.mxu0 0.0
    %278 = vmatprep.subr.mxu0 0.0
    %279 = vmatpush1.msra.mxu0 0.0
    %280 = vmatprep.subr.mxu0 0.0
    %281 = vmatpush1.msra.mxu0 0.0
    %282 = vmatprep.mubr.f32.mxu0 0.0
    %283 = vmatmul.mubr.f32.gmra.mrb[0].mxu0 %v207
    %v284 = vpop.f32.mrb[0].mxu0
    %v285 = vadd.f32 %v188, %v284
    %v286 = vpop.f32.mrb[0].mxu0
    %v287 = vadd.f32 %v188, %v286
    %288 = vmatprep.mubr.f32.mxu0 0.0
    %289 = vmatmul.mubr.f32.gmra.mrb[0].mxu0 %v210
    %v290 = vpop.f32.mrb[0].mxu0
    %v291 = vadd.f32 %v193, %v290
    %v292 = vpop.f32.mrb[0].mxu0
    %v293 = vadd.f32 %v193, %v292
    %294 = vmatprep.mubr.f32.mxu0 0.0
    %295 = vmatmul.mubr.f32.gmra.mrb[0].mxu0 %v213
    %v296 = vpop.f32.mrb[0].mxu0
    %v297 = vadd.f32 %v198, %v296
    %v298 = vpop.f32.mrb[0].mxu0
    %v299 = vadd.f32 %v198, %v298
    %300 = vmatprep.mubr.f32.mxu0 0.0
    %301 = vmatmul.mubr.f32.gmra.mrb[0].mxu0 %v216
    %v302 = vpop.f32.mrb[0].mxu0
    %v303 = vadd.f32 %v203, %v302
    %v304 = vpop.f32.mrb[0].mxu0
    %v305 = vadd.f32 %v203, %v304
    %306 = vdwg.mxu0
    %307 = vmatprep.subr.mxu0 %v139
    %308 = vmatpush1.msra.mxu0 %v138
    %309 = vmatprep.subr.mxu0 %v147
    %310 = vmatpush1.msra.mxu0 %v146
    %311 = vmatprep.subr.mxu0 %v155
    %312 = vmatpush1.msra.mxu0 %v154
    %313 = vmatprep.subr.mxu0 %v163
    %314 = vmatpush1.msra.mxu0 %v162
    %315 = vmatprep.subr.mxu0 %v171
    %316 = vmatpush1.msra.mxu0 %v170
    %317 = vmatprep.subr.mxu0 %v140
    %318 = vmatpush1.msra.mxu0 %v139
    %319 = vmatprep.subr.mxu0 %v148
    %320 = vmatpush1.msra.mxu0 %v147
    %321 = vmatprep.subr.mxu0 %v156
    %322 = vmatpush1.msra.mxu0 %v155
    %323 = vmatprep.subr.mxu0 %v164
    %324 = vmatpush1.msra.mxu0 %v163
    %325 = vmatprep.subr.mxu0 %v172
    %326 = vmatpush1.msra.mxu0 %v171
    %327 = vmatprep.subr.mxu0 %v141
    %328 = vmatpush1.msra.mxu0 %v140
    %329 = vmatprep.subr.mxu0 %v149
    %330 = vmatpush1.msra.mxu0 %v148
    %331 = vmatprep.subr.mxu0 %v157
    %332 = vmatpush1.msra.mxu0 %v156
    %333 = vmatprep.subr.mxu0 %v165
    %334 = vmatpush1.msra.mxu0 %v164
    %335 = vmatprep.subr.mxu0 %v173
    %336 = vmatpush1.msra.mxu0 %v172
    %337 = vmatprep.subr.mxu0 0.0
    %338 = vmatpush1.msra.mxu0 0.0
    %339 = vmatprep.subr.mxu0 0.0
    %340 = vmatpush1.msra.mxu0 0.0
    %341 = vmatprep.subr.mxu0 0.0
    %342 = vmatpush1.msra.mxu0 0.0
    %343 = vmatprep.subr.mxu0 0.0
    %344 = vmatpush1.msra.mxu0 0.0
    %345 = vmatprep.subr.mxu0 0.0
    %346 = vmatpush1.msra.mxu0 0.0
    %347 = vmatprep.subr.mxu0 0.0
    %348 = vmatpush1.msra.mxu0 0.0
    %349 = vmatprep.subr.mxu0 0.0
    %350 = vmatpush1.msra.mxu0 0.0
    %351 = vmatprep.subr.mxu0 0.0
    %352 = vmatpush1.msra.mxu0 0.0
    %353 = vmatprep.subr.mxu0 0.0
    %354 = vmatpush1.msra.mxu0 0.0
    %355 = vmatprep.subr.mxu0 0.0
    %356 = vmatpush1.msra.mxu0 0.0
    %357 = vmatprep.subr.mxu0 0.0
    %358 = vmatpush1.msra.mxu0 0.0
    %359 = vmatprep.subr.mxu0 0.0
    %360 = vmatpush1.msra.mxu0 0.0
    %361 = vmatprep.subr.mxu0 0.0
    %362 = vmatpush1.msra.mxu0 0.0
    %363 = vmatprep.subr.mxu0 0.0
    %364 = vmatpush1.msra.mxu0 0.0
    %365 = vmatprep.subr.mxu0 0.0
    %366 = vmatpush1.msra.mxu0 0.0
    %367 = vmatprep.subr.mxu0 0.0
    %368 = vmatpush1.msra.mxu0 0.0
    %369 = vmatprep.subr.mxu0 0.0
    %370 = vmatpush1.msra.mxu0 0.0
    %371 = vmatprep.mubr.f32.mxu0 0.0
    %372 = vmatmul.mubr.f32.gmra.mrb[0].mxu0 %v207
    %v373 = vpop.f32.mrb[0].mxu0
    %v374 = vadd.f32 %v188, %v373
    %v375 = vpop.f32.mrb[0].mxu0
    %v376 = vadd.f32 %v188, %v375
    %377 = vmatprep.mubr.f32.mxu0 0.0
    %378 = vmatmul.mubr.f32.gmra.mrb[0].mxu0 %v210
    %v379 = vpop.f32.mrb[0].mxu0
    %v380 = vadd.f32 %v193, %v379
    %v381 = vpop.f32.mrb[0].mxu0
    %v382 = vadd.f32 %v193, %v381
    %383 = vmatprep.mubr.f32.mxu0 0.0
    %384 = vmatmul.mubr.f32.gmra.mrb[0].mxu0 %v213
    %v385 = vpop.f32.mrb[0].mxu0
    %v386 = vadd.f32 %v198, %v385
    %v387 = vpop.f32.mrb[0].mxu0
    %v388 = vadd.f32 %v198, %v387
    %389 = vmatprep.mubr.f32.mxu0 0.0
    %390 = vmatmul.mubr.f32.gmra.mrb[0].mxu0 %v216
    %v391 = vpop.f32.mrb[0].mxu0
    %v392 = vadd.f32 %v203, %v391
    %v393 = vpop.f32.mrb[0].mxu0
    %v394 = vadd.f32 %v203, %v393
    %395 = vdwg.mxu0
    %396 = vmatprep.subr.mxu0 %v141
    %397 = vmatpush1.msra.mxu0 %v140
    %398 = vmatprep.subr.mxu0 %v149
    %399 = vmatpush1.msra.mxu0 %v148
    %400 = vmatprep.subr.mxu0 %v157
    %401 = vmatpush1.msra.mxu0 %v156
    %402 = vmatprep.subr.mxu0 %v165
    %403 = vmatpush1.msra.mxu0 %v164
    %404 = vmatprep.subr.mxu0 %v173
    %405 = vmatpush1.msra.mxu0 %v172
    %406 = vmatprep.subr.mxu0 %v142
    %407 = vmatpush1.msra.mxu0 %v141
    %408 = vmatprep.subr.mxu0 %v150
    %409 = vmatpush1.msra.mxu0 %v149
    %410 = vmatprep.subr.mxu0 %v158
    %411 = vmatpush1.msra.mxu0 %v157
    %412 = vmatprep.subr.mxu0 %v166
    %413 = vmatpush1.msra.mxu0 %v165
    %414 = vmatprep.subr.mxu0 %v174
    %415 = vmatpush1.msra.mxu0 %v173
    %416 = vmatprep.subr.mxu0 %v143
    %417 = vmatpush1.msra.mxu0 %v142
    %418 = vmatprep.subr.mxu0 %v151
    %419 = vmatpush1.msra.mxu0 %v150
    %420 = vmatprep.subr.mxu0 %v159
    %421 = vmatpush1.msra.mxu0 %v158
    %422 = vmatprep.subr.mxu0 %v167
    %423 = vmatpush1.msra.mxu0 %v166
    %424 = vmatprep.subr.mxu0 %v175
    %425 = vmatpush1.msra.mxu0 %v174
    %426 = vmatprep.subr.mxu0 0.0
    %427 = vmatpush1.msra.mxu0 0.0
    %428 = vmatprep.subr.mxu0 0.0
    %429 = vmatpush1.msra.mxu0 0.0
    %430 = vmatprep.subr.mxu0 0.0
    %431 = vmatpush1.msra.mxu0 0.0
    %432 = vmatprep.subr.mxu0 0.0
    %433 = vmatpush1.msra.mxu0 0.0
    %434 = vmatprep.subr.mxu0 0.0
    %435 = vmatpush1.msra.mxu0 0.0
    %436 = vmatprep.subr.mxu0 0.0
    %437 = vmatpush1.msra.mxu0 0.0
    %438 = vmatprep.subr.mxu0 0.0
    %439 = vmatpush1.msra.mxu0 0.0
    %440 = vmatprep.subr.mxu0 0.0
    %441 = vmatpush1.msra.mxu0 0.0
    %442 = vmatprep.subr.mxu0 0.0
    %443 = vmatpush1.msra.mxu0 0.0
    %444 = vmatprep.subr.mxu0 0.0
    %445 = vmatpush1.msra.mxu0 0.0
    %446 = vmatprep.subr.mxu0 0.0
    %447 = vmatpush1.msra.mxu0 0.0
    %448 = vmatprep.subr.mxu0 0.0
    %449 = vmatpush1.msra.mxu0 0.0
    %450 = vmatprep.subr.mxu0 0.0
    %451 = vmatpush1.msra.mxu0 0.0
    %452 = vmatprep.subr.mxu0 0.0
    %453 = vmatpush1.msra.mxu0 0.0
    %454 = vmatprep.subr.mxu0 0.0
    %455 = vmatpush1.msra.mxu0 0.0
    %456 = vmatprep.subr.mxu0 0.0
    %457 = vmatpush1.msra.mxu0 0.0
    %458 = vmatprep.subr.mxu0 0.0
    %459 = vmatpush1.msra.mxu0 0.0
    %460 = vmatprep.mubr.f32.mxu0 0.0
    %461 = vmatmul.mubr.f32.gmra.mrb[0].mxu0 %v207
    %v462 = vpop.f32.mrb[0].mxu0
    %v463 = vadd.f32 %v188, %v462
    %v464 = vpop.f32.mrb[0].mxu0
    %v465 = vadd.f32 %v188, %v464
    %466 = vmatprep.mubr.f32.mxu0 0.0
    %467 = vmatmul.mubr.f32.gmra.mrb[0].mxu0 %v210
    %v468 = vpop.f32.mrb[0].mxu0
    %v469 = vadd.f32 %v193, %v468
    %v470 = vpop.f32.mrb[0].mxu0
    %v471 = vadd.f32 %v193, %v470
    %472 = vmatprep.mubr.f32.mxu0 0.0
    %473 = vmatmul.mubr.f32.gmra.mrb[0].mxu0 %v213
    %v474 = vpop.f32.mrb[0].mxu0
    %v475 = vadd.f32 %v198, %v474
    %v476 = vpop.f32.mrb[0].mxu0
    %v477 = vadd.f32 %v198, %v476
    %478 = vmatprep.mubr.f32.mxu0 0.0
    %479 = vmatmul.mubr.f32.gmra.mrb[0].mxu0 %v216
    %v480 = vpop.f32.mrb[0].mxu0
    %v481 = vadd.f32 %v203, %v480
    %v482 = vpop.f32.mrb[0].mxu0
    %v483 = vadd.f32 %v203, %v482
    %484 = vdwg.mxu0
    %485 = vmatprep.subr.mxu0 %v143
    %486 = vmatpush1.msra.mxu0 %v142
    %487 = vmatprep.subr.mxu0 %v151
    %488 = vmatpush1.msra.mxu0 %v150
    %489 = vmatprep.subr.mxu0 %v159
    %490 = vmatpush1.msra.mxu0 %v158
    %491 = vmatprep.subr.mxu0 %v167
    %492 = vmatpush1.msra.mxu0 %v166
    %493 = vmatprep.subr.mxu0 %v175
    %494 = vmatpush1.msra.mxu0 %v174
    %495 = vmatprep.subr.mxu0 %v144
    %496 = vmatpush1.msra.mxu0 %v143
    %497 = vmatprep.subr.mxu0 %v152
    %498 = vmatpush1.msra.mxu0 %v151
    %499 = vmatprep.subr.mxu0 %v160
    %500 = vmatpush1.msra.mxu0 %v159
    %501 = vmatprep.subr.mxu0 %v168
    %502 = vmatpush1.msra.mxu0 %v167
    %503 = vmatprep.subr.mxu0 %v176
    %504 = vmatpush1.msra.mxu0 %v175
    %505 = vmatprep.subr.mxu0 0.0
    %506 = vmatpush1.msra.mxu0 %v144
    %507 = vmatprep.subr.mxu0 0.0
    %508 = vmatpush1.msra.mxu0 %v152
    %509 = vmatprep.subr.mxu0 0.0
    %510 = vmatpush1.msra.mxu0 %v160
    %511 = vmatprep.subr.mxu0 0.0
    %512 = vmatpush1.msra.mxu0 %v168
    %513 = vmatprep.subr.mxu0 0.0
    %514 = vmatpush1.msra.mxu0 %v176
    %515 = vmatprep.subr.mxu0 0.0
    %516 = vmatpush1.msra.mxu0 0.0
    %517 = vmatprep.subr.mxu0 0.0
    %518 = vmatpush1.msra.mxu0 0.0
    %519 = vmatprep.subr.mxu0 0.0
    %520 = vmatpush1.msra.mxu0 0.0
    %521 = vmatprep.subr.mxu0 0.0
    %522 = vmatpush1.msra.mxu0 0.0
    %523 = vmatprep.subr.mxu0 0.0
    %524 = vmatpush1.msra.mxu0 0.0
    %525 = vmatprep.subr.mxu0 0.0
    %526 = vmatpush1.msra.mxu0 0.0
    %527 = vmatprep.subr.mxu0 0.0
    %528 = vmatpush1.msra.mxu0 0.0
    %529 = vmatprep.subr.mxu0 0.0
    %530 = vmatpush1.msra.mxu0 0.0
    %531 = vmatprep.subr.mxu0 0.0
    %532 = vmatpush1.msra.mxu0 0.0
    %533 = vmatprep.subr.mxu0 0.0
    %534 = vmatpush1.msra.mxu0 0.0
    %535 = vmatprep.subr.mxu0 0.0
    %536 = vmatpush1.msra.mxu0 0.0
    %537 = vmatprep.subr.mxu0 0.0
    %538 = vmatpush1.msra.mxu0 0.0
    %539 = vmatprep.subr.mxu0 0.0
    %540 = vmatpush1.msra.mxu0 0.0
    %541 = vmatprep.subr.mxu0 0.0
    %542 = vmatpush1.msra.mxu0 0.0
    %543 = vmatprep.subr.mxu0 0.0
    %544 = vmatpush1.msra.mxu0 0.0
    %545 = vmatprep.subr.mxu0 0.0
    %546 = vmatpush1.msra.mxu0 0.0
    %547 = vmatprep.subr.mxu0 0.0
    %548 = vmatpush1.msra.mxu0 0.0
    %549 = vmatprep.mubr.f32.mxu0 0.0
    %550 = vmatmul.mubr.f32.gmra.mrb[0].mxu0 %v207
    %v551 = vpop.f32.mrb[0].mxu0
    %v552 = vadd.f32 %v188, %v551
    %v553 = vpop.f32.mrb[0].mxu0
    %v554 = vadd.f32 %v188, %v553
    %555 = vmatprep.mubr.f32.mxu0 0.0
    %556 = vmatmul.mubr.f32.gmra.mrb[0].mxu0 %v210
    %v557 = vpop.f32.mrb[0].mxu0
    %v558 = vadd.f32 %v193, %v557
    %v559 = vpop.f32.mrb[0].mxu0
    %v560 = vadd.f32 %v193, %v559
    %561 = vmatprep.mubr.f32.mxu0 0.0
    %562 = vmatmul.mubr.f32.gmra.mrb[0].mxu0 %v213
    %v563 = vpop.f32.mrb[0].mxu0
    %v564 = vadd.f32 %v198, %v563
    %v565 = vpop.f32.mrb[0].mxu0
    %v566 = vadd.f32 %v198, %v565
    %567 = vmatprep.mubr.f32.mxu0 0.0
    %568 = vmatmul.mubr.f32.gmra.mrb[0].mxu0 %v216
    %v569 = vpop.f32.mrb[0].mxu0
    %v570 = vadd.f32 %v203, %v569
    %v571 = vpop.f32.mrb[0].mxu0
    %v572 = vadd.f32 %v203, %v571
    %573 = vdwg.mxu0
    %v574 = vmax.f32 %v285, 0.0
    %v575 = vmax.f32 %v287, 0.0
    %v576 = vmax.f32 %v374, 0.0
    %v577 = vmax.f32 %v376, 0.0
    %v578 = vmax.f32 %v463, 0.0
    %v579 = vmax.f32 %v465, 0.0
    %v580 = vmax.f32 %v552, 0.0
    %v581 = vmax.f32 %v554, 0.0
    %v582 = vmax.f32 %v291, 0.0
    %v583 = vmax.f32 %v293, 0.0
    %v584 = vmax.f32 %v380, 0.0
    %v585 = vmax.f32 %v382, 0.0
    %v586 = vmax.f32 %v469, 0.0
    %v587 = vmax.f32 %v471, 0.0
    %v588 = vmax.f32 %v558, 0.0
    %v589 = vmax.f32 %v560, 0.0
    %v590 = vmax.f32 %v297, 0.0
    %v591 = vmax.f32 %v299, 0.0
    %v592 = vmax.f32 %v386, 0.0
    %v593 = vmax.f32 %v388, 0.0
    %v594 = vmax.f32 %v475, 0.0
    %v595 = vmax.f32 %v477, 0.0
    %v596 = vmax.f32 %v564, 0.0
    %v597 = vmax.f32 %v566, 0.0
    %v598 = vmax.f32 %v303, 0.0
    %v599 = vmax.f32 %v305, 0.0
    %v600 = vmax.f32 %v392, 0.0
    %v601 = vmax.f32 %v394, 0.0
    %v602 = vmax.f32 %v481, 0.0
    %v603 = vmax.f32 %v483, 0.0
    %v604 = vmax.f32 %v570, 0.0
    %v605 = vmax.f32 %v572, 0.0
    %v606 = vld [vmem:[%s2] sm:$0xff]
    %v607 = vld [vmem:[%s2 + $0x8] sm:$0xff]
    %v608 = vld [vmem:[%s2 + $0x10] sm:$0xff]
    %v609 = vld [vmem:[%s2 + $0x18] sm:$0xff]
    %s610 = scalar_lea.vmem %s3, 32
    %v611 = vld [vmem:[%s610] sm:$0xff]
    %v612 = vld [vmem:[%s610 + $0x8] sm:$0xff]
    %v613 = vld [vmem:[%s610 + $0x10] sm:$0xff]
    %v614 = vld [vmem:[%s610 + $0x18] sm:$0xff]
    %616 = vset.pattern.permute.xlu0 0
    %617 = vperm.xlu0 %616, %v611
    %v618 = vpop.permute.xlu0 %617
    %621 = vset.pattern.permute.xlu0 0
    %622 = vperm.xlu0 %621, %v612
    %v623 = vpop.permute.xlu0 %622
    %626 = vset.pattern.permute.xlu0 0
    %627 = vperm.xlu0 %626, %v613
    %v628 = vpop.permute.xlu0 %627
    %631 = vset.pattern.permute.xlu0 0
    %632 = vperm.xlu0 %631, %v614
    %v633 = vpop.permute.xlu0 %632
    %vm635 = vcmask 785408
    %v637 = vsel %vm635, %v606, 0
    %v640 = vsel %vm635, %v607, 0
    %v643 = vsel %vm635, %v608, 0
    %v646 = vsel %vm635, %v609, 0
    %648 = vmatprep.subr.mxu0 %v574
    %649 = vmatpush1.msra.mxu0 0.0
    %650 = vmatprep.subr.mxu0 %v582
    %651 = vmatpush1.msra.mxu0 0.0
    %652 = vmatprep.subr.mxu0 %v590
    %653 = vmatpush1.msra.mxu0 0.0
    %654 = vmatprep.subr.mxu0 %v598
    %655 = vmatpush1.msra.mxu0 0.0
    %656 = vmatprep.subr.mxu0 %v575
    %657 = vmatpush1.msra.mxu0 %v574
    %658 = vmatprep.subr.mxu0 %v583
    %659 = vmatpush1.msra.mxu0 %v582
    %660 = vmatprep.subr.mxu0 %v591
    %661 = vmatpush1.msra.mxu0 %v590
    %662 = vmatprep.subr.mxu0 %v599
    %663 = vmatpush1.msra.mxu0 %v598
    %664 = vmatprep.subr.mxu0 %v576
    %665 = vmatpush1.msra.mxu0 %v575
    %666 = vmatprep.subr.mxu0 %v584
    %667 = vmatpush1.msra.mxu0 %v583
    %668 = vmatprep.subr.mxu0 %v592
    %669 = vmatpush1.msra.mxu0 %v591
    %670 = vmatprep.subr.mxu0 %v600
    %671 = vmatpush1.msra.mxu0 %v599
    %672 = vmatprep.subr.mxu0 0.0
    %673 = vmatpush1.msra.mxu0 0.0
    %674 = vmatprep.subr.mxu0 0.0
    %675 = vmatpush1.msra.mxu0 0.0
    %676 = vmatprep.subr.mxu0 0.0
    %677 = vmatpush1.msra.mxu0 0.0
    %678 = vmatprep.subr.mxu0 0.0
    %679 = vmatpush1.msra.mxu0 0.0
    %680 = vmatprep.subr.mxu0 0.0
    %681 = vmatpush1.msra.mxu0 0.0
    %682 = vmatprep.subr.mxu0 0.0
    %683 = vmatpush1.msra.mxu0 0.0
    %684 = vmatprep.subr.mxu0 0.0
    %685 = vmatpush1.msra.mxu0 0.0
    %686 = vmatprep.subr.mxu0 0.0
    %687 = vmatpush1.msra.mxu0 0.0
    %688 = vmatprep.subr.mxu0 0.0
    %689 = vmatpush1.msra.mxu0 0.0
    %690 = vmatprep.subr.mxu0 0.0
    %691 = vmatpush1.msra.mxu0 0.0
    %692 = vmatprep.subr.mxu0 0.0
    %693 = vmatpush1.msra.mxu0 0.0
    %694 = vmatprep.subr.mxu0 0.0
    %695 = vmatpush1.msra.mxu0 0.0
    %696 = vmatprep.subr.mxu0 0.0
    %697 = vmatpush1.msra.mxu0 0.0
    %698 = vmatprep.subr.mxu0 0.0
    %699 = vmatpush1.msra.mxu0 0.0
    %700 = vmatprep.subr.mxu0 0.0
    %701 = vmatpush1.msra.mxu0 0.0
    %702 = vmatprep.subr.mxu0 0.0
    %703 = vmatpush1.msra.mxu0 0.0
    %704 = vmatprep.subr.mxu0 0.0
    %705 = vmatpush1.msra.mxu0 0.0
    %706 = vmatprep.subr.mxu0 0.0
    %707 = vmatpush1.msra.mxu0 0.0
    %708 = vmatprep.subr.mxu0 0.0
    %709 = vmatpush1.msra.mxu0 0.0
    %710 = vmatprep.subr.mxu0 0.0
    %711 = vmatpush1.msra.mxu0 0.0
    %712 = vmatprep.mubr.f32.mxu0 0.0
    %713 = vmatmul.mubr.f32.gmra.mrb[0].mxu0 %v637
    %v714 = vpop.f32.mrb[0].mxu0
    %v715 = vadd.f32 %v618, %v714
    %v716 = vpop.f32.mrb[0].mxu0
    %v717 = vadd.f32 %v618, %v716
    %718 = vmatprep.mubr.f32.mxu0 0.0
    %719 = vmatmul.mubr.f32.gmra.mrb[0].mxu0 %v640
    %v720 = vpop.f32.mrb[0].mxu0
    %v721 = vadd.f32 %v623, %v720
    %v722 = vpop.f32.mrb[0].mxu0
    %v723 = vadd.f32 %v623, %v722
    %724 = vmatprep.mubr.f32.mxu0 0.0
    %725 = vmatmul.mubr.f32.gmra.mrb[0].mxu0 %v643
    %v726 = vpop.f32.mrb[0].mxu0
    %v727 = vadd.f32 %v628, %v726
    %v728 = vpop.f32.mrb[0].mxu0
    %v729 = vadd.f32 %v628, %v728
    %730 = vmatprep.mubr.f32.mxu0 0.0
    %731 = vmatmul.mubr.f32.gmra.mrb[0].mxu0 %v646
    %v732 = vpop.f32.mrb[0].mxu0
    %v733 = vadd.f32 %v633, %v732
    %v734 = vpop.f32.mrb[0].mxu0
    %v735 = vadd.f32 %v633, %v734
    %736 = vdwg.mxu0
    %737 = vmatprep.subr.mxu0 %v576
    %738 = vmatpush1.msra.mxu0 %v575
    %739 = vmatprep.subr.mxu0 %v584
    %740 = vmatpush1.msra.mxu0 %v583
    %741 = vmatprep.subr.mxu0 %v592
    %742 = vmatpush1.msra.mxu0 %v591
    %743 = vmatprep.subr.mxu0 %v600
    %744 = vmatpush1.msra.mxu0 %v599
    %745 = vmatprep.subr.mxu0 %v577
    %746 = vmatpush1.msra.mxu0 %v576
    %747 = vmatprep.subr.mxu0 %v585
    %748 = vmatpush1.msra.mxu0 %v584
    %749 = vmatprep.subr.mxu0 %v593
    %750 = vmatpush1.msra.mxu0 %v592
    %751 = vmatprep.subr.mxu0 %v601
    %752 = vmatpush1.msra.mxu0 %v600
    %753 = vmatprep.subr.mxu0 %v578
    %754 = vmatpush1.msra.mxu0 %v577
    %755 = vmatprep.subr.mxu0 %v586
    %756 = vmatpush1.msra.mxu0 %v585
    %757 = vmatprep.subr.mxu0 %v594
    %758 = vmatpush1.msra.mxu0 %v593
    %759 = vmatprep.subr.mxu0 %v602
    %760 = vmatpush1.msra.mxu0 %v601
    %761 = vmatprep.subr.mxu0 0.0
    %762 = vmatpush1.msra.mxu0 0.0
    %763 = vmatprep.subr.mxu0 0.0
    %764 = vmatpush1.msra.mxu0 0.0
    %765 = vmatprep.subr.mxu0 0.0
    %766 = vmatpush1.msra.mxu0 0.0
    %767 = vmatprep.subr.mxu0 0.0
    %768 = vmatpush1.msra.mxu0 0.0
    %769 = vmatprep.subr.mxu0 0.0
    %770 = vmatpush1.msra.mxu0 0.0
    %771 = vmatprep.subr.mxu0 0.0
    %772 = vmatpush1.msra.mxu0 0.0
    %773 = vmatprep.subr.mxu0 0.0
    %774 = vmatpush1.msra.mxu0 0.0
    %775 = vmatprep.subr.mxu0 0.0
    %776 = vmatpush1.msra.mxu0 0.0
    %777 = vmatprep.subr.mxu0 0.0
    %778 = vmatpush1.msra.mxu0 0.0
    %779 = vmatprep.subr.mxu0 0.0
    %780 = vmatpush1.msra.mxu0 0.0
    %781 = vmatprep.subr.mxu0 0.0
    %782 = vmatpush1.msra.mxu0 0.0
    %783 = vmatprep.subr.mxu0 0.0
    %784 = vmatpush1.msra.mxu0 0.0
    %785 = vmatprep.subr.mxu0 0.0
    %786 = vmatpush1.msra.mxu0 0.0
    %787 = vmatprep.subr.mxu0 0.0
    %788 = vmatpush1.msra.mxu0 0.0
    %789 = vmatprep.subr.mxu0 0.0
    %790 = vmatpush1.msra.mxu0 0.0
    %791 = vmatprep.subr.mxu0 0.0
    %792 = vmatpush1.msra.mxu0 0.0
    %793 = vmatprep.subr.mxu0 0.0
    %794 = vmatpush1.msra.mxu0 0.0
    %795 = vmatprep.subr.mxu0 0.0
    %796 = vmatpush1.msra.mxu0 0.0
    %797 = vmatprep.subr.mxu0 0.0
    %798 = vmatpush1.msra.mxu0 0.0
    %799 = vmatprep.subr.mxu0 0.0
    %800 = vmatpush1.msra.mxu0 0.0
    %801 = vmatprep.mubr.f32.mxu0 0.0
    %802 = vmatmul.mubr.f32.gmra.mrb[0].mxu0 %v637
    %v803 = vpop.f32.mrb[0].mxu0
    %v804 = vadd.f32 %v618, %v803
    %v805 = vpop.f32.mrb[0].mxu0
    %v806 = vadd.f32 %v618, %v805
    %807 = vmatprep.mubr.f32.mxu0 0.0
    %808 = vmatmul.mubr.f32.gmra.mrb[0].mxu0 %v640
    %v809 = vpop.f32.mrb[0].mxu0
    %v810 = vadd.f32 %v623, %v809
    %v811 = vpop.f32.mrb[0].mxu0
    %v812 = vadd.f32 %v623, %v811
    %813 = vmatprep.mubr.f32.mxu0 0.0
    %814 = vmatmul.mubr.f32.gmra.mrb[0].mxu0 %v643
    %v815 = vpop.f32.mrb[0].mxu0
    %v816 = vadd.f32 %v628, %v815
    %v817 = vpop.f32.mrb[0].mxu0
    %v818 = vadd.f32 %v628, %v817
    %819 = vmatprep.mubr.f32.mxu0 0.0
    %820 = vmatmul.mubr.f32.gmra.mrb[0].mxu0 %v646
    %v821 = vpop.f32.mrb[0].mxu0
    %v822 = vadd.f32 %v633, %v821
    %v823 = vpop.f32.mrb[0].mxu0
    %v824 = vadd.f32 %v633, %v823
    %825 = vdwg.mxu0
    %826 = vmatprep.subr.mxu0 %v578
    %827 = vmatpush1.msra.mxu0 %v577
    %828 = vmatprep.subr.mxu0 %v586
    %829 = vmatpush1.msra.mxu0 %v585
    %830 = vmatprep.subr.mxu0 %v594
    %831 = vmatpush1.msra.mxu0 %v593
    %832 = vmatprep.subr.mxu0 %v602
    %833 = vmatpush1.msra.mxu0 %v601
    %834 = vmatprep.subr.mxu0 %v579
    %835 = vmatpush1.msra.mxu0 %v578
    %836 = vmatprep.subr.mxu0 %v587
    %837 = vmatpush1.msra.mxu0 %v586
    %838 = vmatprep.subr.mxu0 %v595
    %839 = vmatpush1.msra.mxu0 %v594
    %840 = vmatprep.subr.mxu0 %v603
    %841 = vmatpush1.msra.mxu0 %v602
    %842 = vmatprep.subr.mxu0 %v580
    %843 = vmatpush1.msra.mxu0 %v579
    %844 = vmatprep.subr.mxu0 %v588
    %845 = vmatpush1.msra.mxu0 %v587
    %846 = vmatprep.subr.mxu0 %v596
    %847 = vmatpush1.msra.mxu0 %v595
    %848 = vmatprep.subr.mxu0 %v604
    %849 = vmatpush1.msra.mxu0 %v603
    %850 = vmatprep.subr.mxu0 0.0
    %851 = vmatpush1.msra.mxu0 0.0
    %852 = vmatprep.subr.mxu0 0.0
    %853 = vmatpush1.msra.mxu0 0.0
    %854 = vmatprep.subr.mxu0 0.0
    %855 = vmatpush1.msra.mxu0 0.0
    %856 = vmatprep.subr.mxu0 0.0
    %857 = vmatpush1.msra.mxu0 0.0
    %858 = vmatprep.subr.mxu0 0.0
    %859 = vmatpush1.msra.mxu0 0.0
    %860 = vmatprep.subr.mxu0 0.0
    %861 = vmatpush1.msra.mxu0 0.0
    %862 = vmatprep.subr.mxu0 0.0
    %863 = vmatpush1.msra.mxu0 0.0
    %864 = vmatprep.subr.mxu0 0.0
    %865 = vmatpush1.msra.mxu0 0.0
    %866 = vmatprep.subr.mxu0 0.0
    %867 = vmatpush1.msra.mxu0 0.0
    %868 = vmatprep.subr.mxu0 0.0
    %869 = vmatpush1.msra.mxu0 0.0
    %870 = vmatprep.subr.mxu0 0.0
    %871 = vmatpush1.msra.mxu0 0.0
    %872 = vmatprep.subr.mxu0 0.0
    %873 = vmatpush1.msra.mxu0 0.0
    %874 = vmatprep.subr.mxu0 0.0
    %875 = vmatpush1.msra.mxu0 0.0
    %876 = vmatprep.subr.mxu0 0.0
    %877 = vmatpush1.msra.mxu0 0.0
    %878 = vmatprep.subr.mxu0 0.0
    %879 = vmatpush1.msra.mxu0 0.0
    %880 = vmatprep.subr.mxu0 0.0
    %881 = vmatpush1.msra.mxu0 0.0
    %882 = vmatprep.subr.mxu0 0.0
    %883 = vmatpush1.msra.mxu0 0.0
    %884 = vmatprep.subr.mxu0 0.0
    %885 = vmatpush1.msra.mxu0 0.0
    %886 = vmatprep.subr.mxu0 0.0
    %887 = vmatpush1.msra.mxu0 0.0
    %888 = vmatprep.subr.mxu0 0.0
    %889 = vmatpush1.msra.mxu0 0.0
    %890 = vmatprep.mubr.f32.mxu0 0.0
    %891 = vmatmul.mubr.f32.gmra.mrb[0].mxu0 %v637
    %v892 = vpop.f32.mrb[0].mxu0
    %v893 = vadd.f32 %v618, %v892
    %v894 = vpop.f32.mrb[0].mxu0
    %v895 = vadd.f32 %v618, %v894
    %896 = vmatprep.mubr.f32.mxu0 0.0
    %897 = vmatmul.mubr.f32.gmra.mrb[0].mxu0 %v640
    %v898 = vpop.f32.mrb[0].mxu0
    %v899 = vadd.f32 %v623, %v898
    %v900 = vpop.f32.mrb[0].mxu0
    %v901 = vadd.f32 %v623, %v900
    %902 = vmatprep.mubr.f32.mxu0 0.0
    %903 = vmatmul.mubr.f32.gmra.mrb[0].mxu0 %v643
    %v904 = vpop.f32.mrb[0].mxu0
    %v905 = vadd.f32 %v628, %v904
    %v906 = vpop.f32.mrb[0].mxu0
    %v907 = vadd.f32 %v628, %v906
    %908 = vmatprep.mubr.f32.mxu0 0.0
    %909 = vmatmul.mubr.f32.gmra.mrb[0].mxu0 %v646
    %v910 = vpop.f32.mrb[0].mxu0
    %v911 = vadd.f32 %v633, %v910
    %v912 = vpop.f32.mrb[0].mxu0
    %v913 = vadd.f32 %v633, %v912
    %914 = vdwg.mxu0
    %915 = vmatprep.subr.mxu0 %v580
    %916 = vmatpush1.msra.mxu0 %v579
    %917 = vmatprep.subr.mxu0 %v588
    %918 = vmatpush1.msra.mxu0 %v587
    %919 = vmatprep.subr.mxu0 %v596
    %920 = vmatpush1.msra.mxu0 %v595
    %921 = vmatprep.subr.mxu0 %v604
    %922 = vmatpush1.msra.mxu0 %v603
    %923 = vmatprep.subr.mxu0 %v581
    %924 = vmatpush1.msra.mxu0 %v580
    %925 = vmatprep.subr.mxu0 %v589
    %926 = vmatpush1.msra.mxu0 %v588
    %927 = vmatprep.subr.mxu0 %v597
    %928 = vmatpush1.msra.mxu0 %v596
    %929 = vmatprep.subr.mxu0 %v605
    %930 = vmatpush1.msra.mxu0 %v604
    %931 = vmatprep.subr.mxu0 0.0
    %932 = vmatpush1.msra.mxu0 %v581
    %933 = vmatprep.subr.mxu0 0.0
    %934 = vmatpush1.msra.mxu0 %v589
    %935 = vmatprep.subr.mxu0 0.0
    %936 = vmatpush1.msra.mxu0 %v597
    %937 = vmatprep.subr.mxu0 0.0
    %938 = vmatpush1.msra.mxu0 %v605
    %939 = vmatprep.subr.mxu0 0.0
    %940 = vmatpush1.msra.mxu0 0.0
    %941 = vmatprep.subr.mxu0 0.0
    %942 = vmatpush1.msra.mxu0 0.0
    %943 = vmatprep.subr.mxu0 0.0
    %944 = vmatpush1.msra.mxu0 0.0
    %945 = vmatprep.subr.mxu0 0.0
    %946 = vmatpush1.msra.mxu0 0.0
    %947 = vmatprep.subr.mxu0 0.0
    %948 = vmatpush1.msra.mxu0 0.0
    %949 = vmatprep.subr.mxu0 0.0
    %950 = vmatpush1.msra.mxu0 0.0
    %951 = vmatprep.subr.mxu0 0.0
    %952 = vmatpush1.msra.mxu0 0.0
    %953 = vmatprep.subr.mxu0 0.0
    %954 = vmatpush1.msra.mxu0 0.0
    %955 = vmatprep.subr.mxu0 0.0
    %956 = vmatpush1.msra.mxu0 0.0
    %957 = vmatprep.subr.mxu0 0.0
    %958 = vmatpush1.msra.mxu0 0.0
    %959 = vmatprep.subr.mxu0 0.0
    %960 = vmatpush1.msra.mxu0 0.0
    %961 = vmatprep.subr.mxu0 0.0
    %962 = vmatpush1.msra.mxu0 0.0
    %963 = vmatprep.subr.mxu0 0.0
    %964 = vmatpush1.msra.mxu0 0.0
    %965 = vmatprep.subr.mxu0 0.0
    %966 = vmatpush1.msra.mxu0 0.0
    %967 = vmatprep.subr.mxu0 0.0
    %968 = vmatpush1.msra.mxu0 0.0
    %969 = vmatprep.subr.mxu0 0.0
    %970 = vmatpush1.msra.mxu0 0.0
    %971 = vmatprep.subr.mxu0 0.0
    %972 = vmatpush1.msra.mxu0 0.0
    %973 = vmatprep.subr.mxu0 0.0
    %974 = vmatpush1.msra.mxu0 0.0
    %975 = vmatprep.subr.mxu0 0.0
    %976 = vmatpush1.msra.mxu0 0.0
    %977 = vmatprep.subr.mxu0 0.0
    %978 = vmatpush1.msra.mxu0 0.0
    %979 = vmatprep.mubr.f32.mxu0 0.0
    %980 = vmatmul.mubr.f32.gmra.mrb[0].mxu0 %v637
    %v981 = vpop.f32.mrb[0].mxu0
    %v982 = vadd.f32 %v618, %v981
    %v983 = vpop.f32.mrb[0].mxu0
    %v984 = vadd.f32 %v618, %v983
    %985 = vmatprep.mubr.f32.mxu0 0.0
    %986 = vmatmul.mubr.f32.gmra.mrb[0].mxu0 %v640
    %v987 = vpop.f32.mrb[0].mxu0
    %v988 = vadd.f32 %v623, %v987
    %v989 = vpop.f32.mrb[0].mxu0
    %v990 = vadd.f32 %v623, %v989
    %991 = vmatprep.mubr.f32.mxu0 0.0
    %992 = vmatmul.mubr.f32.gmra.mrb[0].mxu0 %v643
    %v993 = vpop.f32.mrb[0].mxu0
    %v994 = vadd.f32 %v628, %v993
    %v995 = vpop.f32.mrb[0].mxu0
    %v996 = vadd.f32 %v628, %v995
    %997 = vmatprep.mubr.f32.mxu0 0.0
    %998 = vmatmul.mubr.f32.gmra.mrb[0].mxu0 %v646
    %v999 = vpop.f32.mrb[0].mxu0
    %v1000 = vadd.f32 %v633, %v999
    %v1001 = vpop.f32.mrb[0].mxu0
    %v1002 = vadd.f32 %v633, %v1001
    %1003 = vdwg.mxu0
    %v1004 = vmax.f32 %v715, 0.0
    %v1005 = vmax.f32 %v717, 0.0
    %v1006 = vmax.f32 %v804, 0.0
    %v1007 = vmax.f32 %v806, 0.0
    %v1008 = vmax.f32 %v893, 0.0
    %v1009 = vmax.f32 %v895, 0.0
    %v1010 = vmax.f32 %v982, 0.0
    %v1011 = vmax.f32 %v984, 0.0
    %v1012 = vmax.f32 %v721, 0.0
    %v1013 = vmax.f32 %v723, 0.0
    %v1014 = vmax.f32 %v810, 0.0
    %v1015 = vmax.f32 %v812, 0.0
    %v1016 = vmax.f32 %v899, 0.0
    %v1017 = vmax.f32 %v901, 0.0
    %v1018 = vmax.f32 %v988, 0.0
    %v1019 = vmax.f32 %v990, 0.0
    %v1020 = vmax.f32 %v727, 0.0
    %v1021 = vmax.f32 %v729, 0.0
    %v1022 = vmax.f32 %v816, 0.0
    %v1023 = vmax.f32 %v818, 0.0
    %v1024 = vmax.f32 %v905, 0.0
    %v1025 = vmax.f32 %v907, 0.0
    %v1026 = vmax.f32 %v994, 0.0
    %v1027 = vmax.f32 %v996, 0.0
    %v1028 = vmax.f32 %v733, 0.0
    %v1029 = vmax.f32 %v735, 0.0
    %v1030 = vmax.f32 %v822, 0.0
    %v1031 = vmax.f32 %v824, 0.0
    %v1032 = vmax.f32 %v911, 0.0
    %v1033 = vmax.f32 %v913, 0.0
    %v1034 = vmax.f32 %v1000, 0.0
    %v1035 = vmax.f32 %v1002, 0.0
    %s1036 = scalar_lea.vmem %s2, 32
    %v1037 = vld [vmem:[%s1036] sm:$0xff]
    %v1038 = vld [vmem:[%s1036 + $0x8] sm:$0xff]
    %v1039 = vld [vmem:[%s1036 + $0x10] sm:$0xff]
    %v1040 = vld [vmem:[%s1036 + $0x18] sm:$0xff]
    %s1041 = scalar_lea.vmem %s3, 64
    %v1042 = vld [vmem:[%s1041] sm:$0xff]
    %v1043 = vld [vmem:[%s1041 + $0x8] sm:$0xff]
    %v1044 = vld [vmem:[%s1041 + $0x10] sm:$0xff]
    %v1045 = vld [vmem:[%s1041 + $0x18] sm:$0xff]
    %1047 = vset.pattern.permute.xlu0 0
    %1048 = vperm.xlu0 %1047, %v1042
    %v1049 = vpop.permute.xlu0 %1048
    %1052 = vset.pattern.permute.xlu0 0
    %1053 = vperm.xlu0 %1052, %v1043
    %v1054 = vpop.permute.xlu0 %1053
    %1057 = vset.pattern.permute.xlu0 0
    %1058 = vperm.xlu0 %1057, %v1044
    %v1059 = vpop.permute.xlu0 %1058
    %1062 = vset.pattern.permute.xlu0 0
    %1063 = vperm.xlu0 %1062, %v1045
    %v1064 = vpop.permute.xlu0 %1063
    %v1067 = vsel %vm635, %v1037, 0
    %v1070 = vsel %vm635, %v1038, 0
    %v1073 = vsel %vm635, %v1039, 0
    %v1076 = vsel %vm635, %v1040, 0
    %1078 = vmatprep.subr.mxu0 %v1004
    %1079 = vmatpush1.msra.mxu0 0.0
    %1080 = vmatprep.subr.mxu0 %v1012
    %1081 = vmatpush1.msra.mxu0 0.0
    %1082 = vmatprep.subr.mxu0 %v1020
    %1083 = vmatpush1.msra.mxu0 0.0
    %1084 = vmatprep.subr.mxu0 %v1028
    %1085 = vmatpush1.msra.mxu0 0.0
    %1086 = vmatprep.subr.mxu0 %v1005
    %1087 = vmatpush1.msra.mxu0 %v1004
    %1088 = vmatprep.subr.mxu0 %v1013
    %1089 = vmatpush1.msra.mxu0 %v1012
    %1090 = vmatprep.subr.mxu0 %v1021
    %1091 = vmatpush1.msra.mxu0 %v1020
    %1092 = vmatprep.subr.mxu0 %v1029
    %1093 = vmatpush1.msra.mxu0 %v1028
    %1094 = vmatprep.subr.mxu0 %v1006
    %1095 = vmatpush1.msra.mxu0 %v1005
    %1096 = vmatprep.subr.mxu0 %v1014
    %1097 = vmatpush1.msra.mxu0 %v1013
    %1098 = vmatprep.subr.mxu0 %v1022
    %1099 = vmatpush1.msra.mxu0 %v1021
    %1100 = vmatprep.subr.mxu0 %v1030
    %1101 = vmatpush1.msra.mxu0 %v1029
    %1102 = vmatprep.subr.mxu0 0.0
    %1103 = vmatpush1.msra.mxu0 0.0
    %1104 = vmatprep.subr.mxu0 0.0
    %1105 = vmatpush1.msra.mxu0 0.0
    %1106 = vmatprep.subr.mxu0 0.0
    %1107 = vmatpush1.msra.mxu0 0.0
    %1108 = vmatprep.subr.mxu0 0.0
    %1109 = vmatpush1.msra.mxu0 0.0
    %1110 = vmatprep.subr.mxu0 0.0
    %1111 = vmatpush1.msra.mxu0 0.0
    %1112 = vmatprep.subr.mxu0 0.0
    %1113 = vmatpush1.msra.mxu0 0.0
    %1114 = vmatprep.subr.mxu0 0.0
    %1115 = vmatpush1.msra.mxu0 0.0
    %1116 = vmatprep.subr.mxu0 0.0
    %1117 = vmatpush1.msra.mxu0 0.0
    %1118 = vmatprep.subr.mxu0 0.0
    %1119 = vmatpush1.msra.mxu0 0.0
    %1120 = vmatprep.subr.mxu0 0.0
    %1121 = vmatpush1.msra.mxu0 0.0
    %1122 = vmatprep.subr.mxu0 0.0
    %1123 = vmatpush1.msra.mxu0 0.0
    %1124 = vmatprep.subr.mxu0 0.0
    %1125 = vmatpush1.msra.mxu0 0.0
    %1126 = vmatprep.subr.mxu0 0.0
    %1127 = vmatpush1.msra.mxu0 0.0
    %1128 = vmatprep.subr.mxu0 0.0
    %1129 = vmatpush1.msra.mxu0 0.0
    %1130 = vmatprep.subr.mxu0 0.0
    %1131 = vmatpush1.msra.mxu0 0.0
    %1132 = vmatprep.subr.mxu0 0.0
    %1133 = vmatpush1.msra.mxu0 0.0
    %1134 = vmatprep.subr.mxu0 0.0
    %1135 = vmatpush1.msra.mxu0 0.0
    %1136 = vmatprep.subr.mxu0 0.0
    %1137 = vmatpush1.msra.mxu0 0.0
    %1138 = vmatprep.subr.mxu0 0.0
    %1139 = vmatpush1.msra.mxu0 0.0
    %1140 = vmatprep.subr.mxu0 0.0
    %1141 = vmatpush1.msra.mxu0 0.0
    %1142 = vmatprep.mubr.f32.mxu0 0.0
    %1143 = vmatmul.mubr.f32.gmra.mrb[0].mxu0 %v1067
    %v1144 = vpop.f32.mrb[0].mxu0
    %v1145 = vadd.f32 %v1049, %v1144
    %v1146 = vpop.f32.mrb[0].mxu0
    %v1147 = vadd.f32 %v1049, %v1146
    %1148 = vmatprep.mubr.f32.mxu0 0.0
    %1149 = vmatmul.mubr.f32.gmra.mrb[0].mxu0 %v1070
    %v1150 = vpop.f32.mrb[0].mxu0
    %v1151 = vadd.f32 %v1054, %v1150
    %v1152 = vpop.f32.mrb[0].mxu0
    %v1153 = vadd.f32 %v1054, %v1152
    %1154 = vmatprep.mubr.f32.mxu0 0.0
    %1155 = vmatmul.mubr.f32.gmra.mrb[0].mxu0 %v1073
    %v1156 = vpop.f32.mrb[0].mxu0
    %v1157 = vadd.f32 %v1059, %v1156
    %v1158 = vpop.f32.mrb[0].mxu0
    %v1159 = vadd.f32 %v1059, %v1158
    %1160 = vmatprep.mubr.f32.mxu0 0.0
    %1161 = vmatmul.mubr.f32.gmra.mrb[0].mxu0 %v1076
    %v1162 = vpop.f32.mrb[0].mxu0
    %v1163 = vadd.f32 %v1064, %v1162
    %v1164 = vpop.f32.mrb[0].mxu0
    %v1165 = vadd.f32 %v1064, %v1164
    %1166 = vdwg.mxu0
    %1167 = vmatprep.subr.mxu0 %v1006
    %1168 = vmatpush1.msra.mxu0 %v1005
    %1169 = vmatprep.subr.mxu0 %v1014
    %1170 = vmatpush1.msra.mxu0 %v1013
    %1171 = vmatprep.subr.mxu0 %v1022
    %1172 = vmatpush1.msra.mxu0 %v1021
    %1173 = vmatprep.subr.mxu0 %v1030
    %1174 = vmatpush1.msra.mxu0 %v1029
    %1175 = vmatprep.subr.mxu0 %v1007
    %1176 = vmatpush1.msra.mxu0 %v1006
    %1177 = vmatprep.subr.mxu0 %v1015
    %1178 = vmatpush1.msra.mxu0 %v1014
    %1179 = vmatprep.subr.mxu0 %v1023
    %1180 = vmatpush1.msra.mxu0 %v1022
    %1181 = vmatprep.subr.mxu0 %v1031
    %1182 = vmatpush1.msra.mxu0 %v1030
    %1183 = vmatprep.subr.mxu0 %v1008
    %1184 = vmatpush1.msra.mxu0 %v1007
    %1185 = vmatprep.subr.mxu0 %v1016
    %1186 = vmatpush1.msra.mxu0 %v1015
    %1187 = vmatprep.subr.mxu0 %v1024
    %1188 = vmatpush1.msra.mxu0 %v1023
    %1189 = vmatprep.subr.mxu0 %v1032
    %1190 = vmatpush1.msra.mxu0 %v1031
    %1191 = vmatprep.subr.mxu0 0.0
    %1192 = vmatpush1.msra.mxu0 0.0
    %1193 = vmatprep.subr.mxu0 0.0
    %1194 = vmatpush1.msra.mxu0 0.0
    %1195 = vmatprep.subr.mxu0 0.0
    %1196 = vmatpush1.msra.mxu0 0.0
    %1197 = vmatprep.subr.mxu0 0.0
    %1198 = vmatpush1.msra.mxu0 0.0
    %1199 = vmatprep.subr.mxu0 0.0
    %1200 = vmatpush1.msra.mxu0 0.0
    %1201 = vmatprep.subr.mxu0 0.0
    %1202 = vmatpush1.msra.mxu0 0.0
    %1203 = vmatprep.subr.mxu0 0.0
    %1204 = vmatpush1.msra.mxu0 0.0
    %1205 = vmatprep.subr.mxu0 0.0
    %1206 = vmatpush1.msra.mxu0 0.0
    %1207 = vmatprep.subr.mxu0 0.0
    %1208 = vmatpush1.msra.mxu0 0.0
    %1209 = vmatprep.subr.mxu0 0.0
    %1210 = vmatpush1.msra.mxu0 0.0
    %1211 = vmatprep.subr.mxu0 0.0
    %1212 = vmatpush1.msra.mxu0 0.0
    %1213 = vmatprep.subr.mxu0 0.0
    %1214 = vmatpush1.msra.mxu0 0.0
    %1215 = vmatprep.subr.mxu0 0.0
    %1216 = vmatpush1.msra.mxu0 0.0
    %1217 = vmatprep.subr.mxu0 0.0
    %1218 = vmatpush1.msra.mxu0 0.0
    %1219 = vmatprep.subr.mxu0 0.0
    %1220 = vmatpush1.msra.mxu0 0.0
    %1221 = vmatprep.subr.mxu0 0.0
    %1222 = vmatpush1.msra.mxu0 0.0
    %1223 = vmatprep.subr.mxu0 0.0
    %1224 = vmatpush1.msra.mxu0 0.0
    %1225 = vmatprep.subr.mxu0 0.0
    %1226 = vmatpush1.msra.mxu0 0.0
    %1227 = vmatprep.subr.mxu0 0.0
    %1228 = vmatpush1.msra.mxu0 0.0
    %1229 = vmatprep.subr.mxu0 0.0
    %1230 = vmatpush1.msra.mxu0 0.0
    %1231 = vmatprep.mubr.f32.mxu0 0.0
    %1232 = vmatmul.mubr.f32.gmra.mrb[0].mxu0 %v1067
    %v1233 = vpop.f32.mrb[0].mxu0
    %v1234 = vadd.f32 %v1049, %v1233
    %v1235 = vpop.f32.mrb[0].mxu0
    %v1236 = vadd.f32 %v1049, %v1235
    %1237 = vmatprep.mubr.f32.mxu0 0.0
    %1238 = vmatmul.mubr.f32.gmra.mrb[0].mxu0 %v1070
    %v1239 = vpop.f32.mrb[0].mxu0
    %v1240 = vadd.f32 %v1054, %v1239
    %v1241 = vpop.f32.mrb[0].mxu0
    %v1242 = vadd.f32 %v1054, %v1241
    %1243 = vmatprep.mubr.f32.mxu0 0.0
    %1244 = vmatmul.mubr.f32.gmra.mrb[0].mxu0 %v1073
    %v1245 = vpop.f32.mrb[0].mxu0
    %v1246 = vadd.f32 %v1059, %v1245
    %v1247 = vpop.f32.mrb[0].mxu0
    %v1248 = vadd.f32 %v1059, %v1247
    %1249 = vmatprep.mubr.f32.mxu0 0.0
    %1250 = vmatmul.mubr.f32.gmra.mrb[0].mxu0 %v1076
    %v1251 = vpop.f32.mrb[0].mxu0
    %v1252 = vadd.f32 %v1064, %v1251
    %v1253 = vpop.f32.mrb[0].mxu0
    %v1254 = vadd.f32 %v1064, %v1253
    %1255 = vdwg.mxu0
    %1256 = vmatprep.subr.mxu0 %v1008
    %1257 = vmatpush1.msra.mxu0 %v1007
    %1258 = vmatprep.subr.mxu0 %v1016
    %1259 = vmatpush1.msra.mxu0 %v1015
    %1260 = vmatprep.subr.mxu0 %v1024
    %1261 = vmatpush1.msra.mxu0 %v1023
    %1262 = vmatprep.subr.mxu0 %v1032
    %1263 = vmatpush1.msra.mxu0 %v1031
    %1264 = vmatprep.subr.mxu0 %v1009
    %1265 = vmatpush1.msra.mxu0 %v1008
    %1266 = vmatprep.subr.mxu0 %v1017
    %1267 = vmatpush1.msra.mxu0 %v1016
    %1268 = vmatprep.subr.mxu0 %v1025
    %1269 = vmatpush1.msra.mxu0 %v1024
    %1270 = vmatprep.subr.mxu0 %v1033
    %1271 = vmatpush1.msra.mxu0 %v1032
    %1272 = vmatprep.subr.mxu0 %v1010
    %1273 = vmatpush1.msra.mxu0 %v1009
    %1274 = vmatprep.subr.mxu0 %v1018
    %1275 = vmatpush1.msra.mxu0 %v1017
    %1276 = vmatprep.subr.mxu0 %v1026
    %1277 = vmatpush1.msra.mxu0 %v1025
    %1278 = vmatprep.subr.mxu0 %v1034
    %1279 = vmatpush1.msra.mxu0 %v1033
    %1280 = vmatprep.subr.mxu0 0.0
    %1281 = vmatpush1.msra.mxu0 0.0
    %1282 = vmatprep.subr.mxu0 0.0
    %1283 = vmatpush1.msra.mxu0 0.0
    %1284 = vmatprep.subr.mxu0 0.0
    %1285 = vmatpush1.msra.mxu0 0.0
    %1286 = vmatprep.subr.mxu0 0.0
    %1287 = vmatpush1.msra.mxu0 0.0
    %1288 = vmatprep.subr.mxu0 0.0
    %1289 = vmatpush1.msra.mxu0 0.0
    %1290 = vmatprep.subr.mxu0 0.0
    %1291 = vmatpush1.msra.mxu0 0.0
    %1292 = vmatprep.subr.mxu0 0.0
    %1293 = vmatpush1.msra.mxu0 0.0
    %1294 = vmatprep.subr.mxu0 0.0
    %1295 = vmatpush1.msra.mxu0 0.0
    %1296 = vmatprep.subr.mxu0 0.0
    %1297 = vmatpush1.msra.mxu0 0.0
    %1298 = vmatprep.subr.mxu0 0.0
    %1299 = vmatpush1.msra.mxu0 0.0
    %1300 = vmatprep.subr.mxu0 0.0
    %1301 = vmatpush1.msra.mxu0 0.0
    %1302 = vmatprep.subr.mxu0 0.0
    %1303 = vmatpush1.msra.mxu0 0.0
    %1304 = vmatprep.subr.mxu0 0.0
    %1305 = vmatpush1.msra.mxu0 0.0
    %1306 = vmatprep.subr.mxu0 0.0
    %1307 = vmatpush1.msra.mxu0 0.0
    %1308 = vmatprep.subr.mxu0 0.0
    %1309 = vmatpush1.msra.mxu0 0.0
    %1310 = vmatprep.subr.mxu0 0.0
    %1311 = vmatpush1.msra.mxu0 0.0
    %1312 = vmatprep.subr.mxu0 0.0
    %1313 = vmatpush1.msra.mxu0 0.0
    %1314 = vmatprep.subr.mxu0 0.0
    %1315 = vmatpush1.msra.mxu0 0.0
    %1316 = vmatprep.subr.mxu0 0.0
    %1317 = vmatpush1.msra.mxu0 0.0
    %1318 = vmatprep.subr.mxu0 0.0
    %1319 = vmatpush1.msra.mxu0 0.0
    %1320 = vmatprep.mubr.f32.mxu0 0.0
    %1321 = vmatmul.mubr.f32.gmra.mrb[0].mxu0 %v1067
    %v1322 = vpop.f32.mrb[0].mxu0
    %v1323 = vadd.f32 %v1049, %v1322
    %v1324 = vpop.f32.mrb[0].mxu0
    %v1325 = vadd.f32 %v1049, %v1324
    %1326 = vmatprep.mubr.f32.mxu0 0.0
    %1327 = vmatmul.mubr.f32.gmra.mrb[0].mxu0 %v1070
    %v1328 = vpop.f32.mrb[0].mxu0
    %v1329 = vadd.f32 %v1054, %v1328
    %v1330 = vpop.f32.mrb[0].mxu0
    %v1331 = vadd.f32 %v1054, %v1330
    %1332 = vmatprep.mubr.f32.mxu0 0.0
    %1333 = vmatmul.mubr.f32.gmra.mrb[0].mxu0 %v1073
    %v1334 = vpop.f32.mrb[0].mxu0
    %v1335 = vadd.f32 %v1059, %v1334
    %v1336 = vpop.f32.mrb[0].mxu0
    %v1337 = vadd.f32 %v1059, %v1336
    %1338 = vmatprep.mubr.f32.mxu0 0.0
    %1339 = vmatmul.mubr.f32.gmra.mrb[0].mxu0 %v1076
    %v1340 = vpop.f32.mrb[0].mxu0
    %v1341 = vadd.f32 %v1064, %v1340
    %v1342 = vpop.f32.mrb[0].mxu0
    %v1343 = vadd.f32 %v1064, %v1342
    %1344 = vdwg.mxu0
    %1345 = vmatprep.subr.mxu0 %v1010
    %1346 = vmatpush1.msra.mxu0 %v1009
    %1347 = vmatprep.subr.mxu0 %v1018
    %1348 = vmatpush1.msra.mxu0 %v1017
    %1349 = vmatprep.subr.mxu0 %v1026
    %1350 = vmatpush1.msra.mxu0 %v1025
    %1351 = vmatprep.subr.mxu0 %v1034
    %1352 = vmatpush1.msra.mxu0 %v1033
    %1353 = vmatprep.subr.mxu0 %v1011
    %1354 = vmatpush1.msra.mxu0 %v1010
    %1355 = vmatprep.subr.mxu0 %v1019
    %1356 = vmatpush1.msra.mxu0 %v1018
    %1357 = vmatprep.subr.mxu0 %v1027
    %1358 = vmatpush1.msra.mxu0 %v1026
    %1359 = vmatprep.subr.mxu0 %v1035
    %1360 = vmatpush1.msra.mxu0 %v1034
    %1361 = vmatprep.subr.mxu0 0.0
    %1362 = vmatpush1.msra.mxu0 %v1011
    %1363 = vmatprep.subr.mxu0 0.0
    %1364 = vmatpush1.msra.mxu0 %v1019
    %1365 = vmatprep.subr.mxu0 0.0
    %1366 = vmatpush1.msra.mxu0 %v1027
    %1367 = vmatprep.subr.mxu0 0.0
    %1368 = vmatpush1.msra.mxu0 %v1035
    %1369 = vmatprep.subr.mxu0 0.0
    %1370 = vmatpush1.msra.mxu0 0.0
    %1371 = vmatprep.subr.mxu0 0.0
    %1372 = vmatpush1.msra.mxu0 0.0
    %1373 = vmatprep.subr.mxu0 0.0
    %1374 = vmatpush1.msra.mxu0 0.0
    %1375 = vmatprep.subr.mxu0 0.0
    %1376 = vmatpush1.msra.mxu0 0.0
    %1377 = vmatprep.subr.mxu0 0.0
    %1378 = vmatpush1.msra.mxu0 0.0
    %1379 = vmatprep.subr.mxu0 0.0
    %1380 = vmatpush1.msra.mxu0 0.0
    %1381 = vmatprep.subr.mxu0 0.0
    %1382 = vmatpush1.msra.mxu0 0.0
    %1383 = vmatprep.subr.mxu0 0.0
    %1384 = vmatpush1.msra.mxu0 0.0
    %1385 = vmatprep.subr.mxu0 0.0
    %1386 = vmatpush1.msra.mxu0 0.0
    %1387 = vmatprep.subr.mxu0 0.0
    %1388 = vmatpush1.msra.mxu0 0.0
    %1389 = vmatprep.subr.mxu0 0.0
    %1390 = vmatpush1.msra.mxu0 0.0
    %1391 = vmatprep.subr.mxu0 0.0
    %1392 = vmatpush1.msra.mxu0 0.0
    %1393 = vmatprep.subr.mxu0 0.0
    %1394 = vmatpush1.msra.mxu0 0.0
    %1395 = vmatprep.subr.mxu0 0.0
    %1396 = vmatpush1.msra.mxu0 0.0
    %1397 = vmatprep.subr.mxu0 0.0
    %1398 = vmatpush1.msra.mxu0 0.0
    %1399 = vmatprep.subr.mxu0 0.0
    %1400 = vmatpush1.msra.mxu0 0.0
    %1401 = vmatprep.subr.mxu0 0.0
    %1402 = vmatpush1.msra.mxu0 0.0
    %1403 = vmatprep.subr.mxu0 0.0
    %1404 = vmatpush1.msra.mxu0 0.0
    %1405 = vmatprep.subr.mxu0 0.0
    %1406 = vmatpush1.msra.mxu0 0.0
    %1407 = vmatprep.subr.mxu0 0.0
    %1408 = vmatpush1.msra.mxu0 0.0
    %1409 = vmatprep.mubr.f32.mxu0 0.0
    %1410 = vmatmul.mubr.f32.gmra.mrb[0].mxu0 %v1067
    %v1411 = vpop.f32.mrb[0].mxu0
    %v1412 = vadd.f32 %v1049, %v1411
    %v1413 = vpop.f32.mrb[0].mxu0
    %v1414 = vadd.f32 %v1049, %v1413
    %1415 = vmatprep.mubr.f32.mxu0 0.0
    %1416 = vmatmul.mubr.f32.gmra.mrb[0].mxu0 %v1070
    %v1417 = vpop.f32.mrb[0].mxu0
    %v1418 = vadd.f32 %v1054, %v1417
    %v1419 = vpop.f32.mrb[0].mxu0
    %v1420 = vadd.f32 %v1054, %v1419
    %1421 = vmatprep.mubr.f32.mxu0 0.0
    %1422 = vmatmul.mubr.f32.gmra.mrb[0].mxu0 %v1073
    %v1423 = vpop.f32.mrb[0].mxu0
    %v1424 = vadd.f32 %v1059, %v1423
    %v1425 = vpop.f32.mrb[0].mxu0
    %v1426 = vadd.f32 %v1059, %v1425
    %1427 = vmatprep.mubr.f32.mxu0 0.0
    %1428 = vmatmul.mubr.f32.gmra.mrb[0].mxu0 %v1076
    %v1429 = vpop.f32.mrb[0].mxu0
    %v1430 = vadd.f32 %v1064, %v1429
    %v1431 = vpop.f32.mrb[0].mxu0
    %v1432 = vadd.f32 %v1064, %v1431
    %1433 = vdwg.mxu0
    %v1434 = vmax.f32 %v1145, 0.0
    %v1435 = vmax.f32 %v1147, 0.0
    %v1436 = vmax.f32 %v1234, 0.0
    %v1437 = vmax.f32 %v1236, 0.0
    %v1438 = vmax.f32 %v1323, 0.0
    %v1439 = vmax.f32 %v1325, 0.0
    %v1440 = vmax.f32 %v1412, 0.0
    %v1441 = vmax.f32 %v1414, 0.0
    %v1442 = vmax.f32 %v1151, 0.0
    %v1443 = vmax.f32 %v1153, 0.0
    %v1444 = vmax.f32 %v1240, 0.0
    %v1445 = vmax.f32 %v1242, 0.0
    %v1446 = vmax.f32 %v1329, 0.0
    %v1447 = vmax.f32 %v1331, 0.0
    %v1448 = vmax.f32 %v1418, 0.0
    %v1449 = vmax.f32 %v1420, 0.0
    %v1450 = vmax.f32 %v1157, 0.0
    %v1451 = vmax.f32 %v1159, 0.0
    %v1452 = vmax.f32 %v1246, 0.0
    %v1453 = vmax.f32 %v1248, 0.0
    %v1454 = vmax.f32 %v1335, 0.0
    %v1455 = vmax.f32 %v1337, 0.0
    %v1456 = vmax.f32 %v1424, 0.0
    %v1457 = vmax.f32 %v1426, 0.0
    %v1458 = vmax.f32 %v1163, 0.0
    %v1459 = vmax.f32 %v1165, 0.0
    %v1460 = vmax.f32 %v1252, 0.0
    %v1461 = vmax.f32 %v1254, 0.0
    %v1462 = vmax.f32 %v1341, 0.0
    %v1463 = vmax.f32 %v1343, 0.0
    %v1464 = vmax.f32 %v1430, 0.0
    %v1465 = vmax.f32 %v1432, 0.0
    %s1466 = scalar_lea.vmem %s2, 64
    %v1467 = vld [vmem:[%s1466] sm:$0xff]
    %v1468 = vld [vmem:[%s1466 + $0x8] sm:$0xff]
    %v1469 = vld [vmem:[%s1466 + $0x10] sm:$0xff]
    %v1470 = vld [vmem:[%s1466 + $0x18] sm:$0xff]
    %s1471 = scalar_lea.vmem %s3, 96
    %v1472 = vld [vmem:[%s1471] sm:$0xff]
    %v1473 = vld [vmem:[%s1471 + $0x8] sm:$0xff]
    %v1474 = vld [vmem:[%s1471 + $0x10] sm:$0xff]
    %v1475 = vld [vmem:[%s1471 + $0x18] sm:$0xff]
    %1477 = vset.pattern.permute.xlu0 0
    %1478 = vperm.xlu0 %1477, %v1472
    %v1479 = vpop.permute.xlu0 %1478
    %1482 = vset.pattern.permute.xlu0 0
    %1483 = vperm.xlu0 %1482, %v1473
    %v1484 = vpop.permute.xlu0 %1483
    %1487 = vset.pattern.permute.xlu0 0
    %1488 = vperm.xlu0 %1487, %v1474
    %v1489 = vpop.permute.xlu0 %1488
    %1492 = vset.pattern.permute.xlu0 0
    %1493 = vperm.xlu0 %1492, %v1475
    %v1494 = vpop.permute.xlu0 %1493
    %v1497 = vsel %vm635, %v1467, 0
    %v1500 = vsel %vm635, %v1468, 0
    %v1503 = vsel %vm635, %v1469, 0
    %v1506 = vsel %vm635, %v1470, 0
    %1508 = vmatprep.subr.mxu0 %v1434
    %1509 = vmatpush1.msra.mxu0 0.0
    %1510 = vmatprep.subr.mxu0 %v1442
    %1511 = vmatpush1.msra.mxu0 0.0
    %1512 = vmatprep.subr.mxu0 %v1450
    %1513 = vmatpush1.msra.mxu0 0.0
    %1514 = vmatprep.subr.mxu0 %v1458
    %1515 = vmatpush1.msra.mxu0 0.0
    %1516 = vmatprep.subr.mxu0 %v1435
    %1517 = vmatpush1.msra.mxu0 %v1434
    %1518 = vmatprep.subr.mxu0 %v1443
    %1519 = vmatpush1.msra.mxu0 %v1442
    %1520 = vmatprep.subr.mxu0 %v1451
    %1521 = vmatpush1.msra.mxu0 %v1450
    %1522 = vmatprep.subr.mxu0 %v1459
    %1523 = vmatpush1.msra.mxu0 %v1458
    %1524 = vmatprep.subr.mxu0 %v1436
    %1525 = vmatpush1.msra.mxu0 %v1435
    %1526 = vmatprep.subr.mxu0 %v1444
    %1527 = vmatpush1.msra.mxu0 %v1443
    %1528 = vmatprep.subr.mxu0 %v1452
    %1529 = vmatpush1.msra.mxu0 %v1451
    %1530 = vmatprep.subr.mxu0 %v1460
    %1531 = vmatpush1.msra.mxu0 %v1459
    %1532 = vmatprep.subr.mxu0 0.0
    %1533 = vmatpush1.msra.mxu0 0.0
    %1534 = vmatprep.subr.mxu0 0.0
    %1535 = vmatpush1.msra.mxu0 0.0
    %1536 = vmatprep.subr.mxu0 0.0
    %1537 = vmatpush1.msra.mxu0 0.0
    %1538 = vmatprep.subr.mxu0 0.0
    %1539 = vmatpush1.msra.mxu0 0.0
    %1540 = vmatprep.subr.mxu0 0.0
    %1541 = vmatpush1.msra.mxu0 0.0
    %1542 = vmatprep.subr.mxu0 0.0
    %1543 = vmatpush1.msra.mxu0 0.0
    %1544 = vmatprep.subr.mxu0 0.0
    %1545 = vmatpush1.msra.mxu0 0.0
    %1546 = vmatprep.subr.mxu0 0.0
    %1547 = vmatpush1.msra.mxu0 0.0
    %1548 = vmatprep.subr.mxu0 0.0
    %1549 = vmatpush1.msra.mxu0 0.0
    %1550 = vmatprep.subr.mxu0 0.0
    %1551 = vmatpush1.msra.mxu0 0.0
    %1552 = vmatprep.subr.mxu0 0.0
    %1553 = vmatpush1.msra.mxu0 0.0
    %1554 = vmatprep.subr.mxu0 0.0
    %1555 = vmatpush1.msra.mxu0 0.0
    %1556 = vmatprep.subr.mxu0 0.0
    %1557 = vmatpush1.msra.mxu0 0.0
    %1558 = vmatprep.subr.mxu0 0.0
    %1559 = vmatpush1.msra.mxu0 0.0
    %1560 = vmatprep.subr.mxu0 0.0
    %1561 = vmatpush1.msra.mxu0 0.0
    %1562 = vmatprep.subr.mxu0 0.0
    %1563 = vmatpush1.msra.mxu0 0.0
    %1564 = vmatprep.subr.mxu0 0.0
    %1565 = vmatpush1.msra.mxu0 0.0
    %1566 = vmatprep.subr.mxu0 0.0
    %1567 = vmatpush1.msra.mxu0 0.0
    %1568 = vmatprep.subr.mxu0 0.0
    %1569 = vmatpush1.msra.mxu0 0.0
    %1570 = vmatprep.subr.mxu0 0.0
    %1571 = vmatpush1.msra.mxu0 0.0
    %1572 = vmatprep.mubr.f32.mxu0 0.0
    %1573 = vmatmul.mubr.f32.gmra.mrb[0].mxu0 %v1497
    %v1574 = vpop.f32.mrb[0].mxu0
    %v1575 = vadd.f32 %v1479, %v1574
    %v1576 = vpop.f32.mrb[0].mxu0
    %v1577 = vadd.f32 %v1479, %v1576
    %1578 = vmatprep.mubr.f32.mxu0 0.0
    %1579 = vmatmul.mubr.f32.gmra.mrb[0].mxu0 %v1500
    %v1580 = vpop.f32.mrb[0].mxu0
    %v1581 = vadd.f32 %v1484, %v1580
    %v1582 = vpop.f32.mrb[0].mxu0
    %v1583 = vadd.f32 %v1484, %v1582
    %1584 = vmatprep.mubr.f32.mxu0 0.0
    %1585 = vmatmul.mubr.f32.gmra.mrb[0].mxu0 %v1503
    %v1586 = vpop.f32.mrb[0].mxu0
    %v1587 = vadd.f32 %v1489, %v1586
    %v1588 = vpop.f32.mrb[0].mxu0
    %v1589 = vadd.f32 %v1489, %v1588
    %1590 = vmatprep.mubr.f32.mxu0 0.0
    %1591 = vmatmul.mubr.f32.gmra.mrb[0].mxu0 %v1506
    %v1592 = vpop.f32.mrb[0].mxu0
    %v1593 = vadd.f32 %v1494, %v1592
    %v1594 = vpop.f32.mrb[0].mxu0
    %v1595 = vadd.f32 %v1494, %v1594
    %1596 = vdwg.mxu0
    %1597 = vmatprep.subr.mxu0 %v1436
    %1598 = vmatpush1.msra.mxu0 %v1435
    %1599 = vmatprep.subr.mxu0 %v1444
    %1600 = vmatpush1.msra.mxu0 %v1443
    %1601 = vmatprep.subr.mxu0 %v1452
    %1602 = vmatpush1.msra.mxu0 %v1451
    %1603 = vmatprep.subr.mxu0 %v1460
    %1604 = vmatpush1.msra.mxu0 %v1459
    %1605 = vmatprep.subr.mxu0 %v1437
    %1606 = vmatpush1.msra.mxu0 %v1436
    %1607 = vmatprep.subr.mxu0 %v1445
    %1608 = vmatpush1.msra.mxu0 %v1444
    %1609 = vmatprep.subr.mxu0 %v1453
    %1610 = vmatpush1.msra.mxu0 %v1452
    %1611 = vmatprep.subr.mxu0 %v1461
    %1612 = vmatpush1.msra.mxu0 %v1460
    %1613 = vmatprep.subr.mxu0 %v1438
    %1614 = vmatpush1.msra.mxu0 %v1437
    %1615 = vmatprep.subr.mxu0 %v1446
    %1616 = vmatpush1.msra.mxu0 %v1445
    %1617 = vmatprep.subr.mxu0 %v1454
    %1618 = vmatpush1.msra.mxu0 %v1453
    %1619 = vmatprep.subr.mxu0 %v1462
    %1620 = vmatpush1.msra.mxu0 %v1461
    %1621 = vmatprep.subr.mxu0 0.0
    %1622 = vmatpush1.msra.mxu0 0.0
    %1623 = vmatprep.subr.mxu0 0.0
    %1624 = vmatpush1.msra.mxu0 0.0
    %1625 = vmatprep.subr.mxu0 0.0
    %1626 = vmatpush1.msra.mxu0 0.0
    %1627 = vmatprep.subr.mxu0 0.0
    %1628 = vmatpush1.msra.mxu0 0.0
    %1629 = vmatprep.subr.mxu0 0.0
    %1630 = vmatpush1.msra.mxu0 0.0
    %1631 = vmatprep.subr.mxu0 0.0
    %1632 = vmatpush1.msra.mxu0 0.0
    %1633 = vmatprep.subr.mxu0 0.0
    %1634 = vmatpush1.msra.mxu0 0.0
    %1635 = vmatprep.subr.mxu0 0.0
    %1636 = vmatpush1.msra.mxu0 0.0
    %1637 = vmatprep.subr.mxu0 0.0
    %1638 = vmatpush1.msra.mxu0 0.0
    %1639 = vmatprep.subr.mxu0 0.0
    %1640 = vmatpush1.msra.mxu0 0.0
    %1641 = vmatprep.subr.mxu0 0.0
    %1642 = vmatpush1.msra.mxu0 0.0
    %1643 = vmatprep.subr.mxu0 0.0
    %1644 = vmatpush1.msra.mxu0 0.0
    %1645 = vmatprep.subr.mxu0 0.0
    %1646 = vmatpush1.msra.mxu0 0.0
    %1647 = vmatprep.subr.mxu0 0.0
    %1648 = vmatpush1.msra.mxu0 0.0
    %1649 = vmatprep.subr.mxu0 0.0
    %1650 = vmatpush1.msra.mxu0 0.0
    %1651 = vmatprep.subr.mxu0 0.0
    %1652 = vmatpush1.msra.mxu0 0.0
    %1653 = vmatprep.subr.mxu0 0.0
    %1654 = vmatpush1.msra.mxu0 0.0
    %1655 = vmatprep.subr.mxu0 0.0
    %1656 = vmatpush1.msra.mxu0 0.0
    %1657 = vmatprep.subr.mxu0 0.0
    %1658 = vmatpush1.msra.mxu0 0.0
    %1659 = vmatprep.subr.mxu0 0.0
    %1660 = vmatpush1.msra.mxu0 0.0
    %1661 = vmatprep.mubr.f32.mxu0 0.0
    %1662 = vmatmul.mubr.f32.gmra.mrb[0].mxu0 %v1497
    %v1663 = vpop.f32.mrb[0].mxu0
    %v1664 = vadd.f32 %v1479, %v1663
    %v1665 = vpop.f32.mrb[0].mxu0
    %v1666 = vadd.f32 %v1479, %v1665
    %1667 = vmatprep.mubr.f32.mxu0 0.0
    %1668 = vmatmul.mubr.f32.gmra.mrb[0].mxu0 %v1500
    %v1669 = vpop.f32.mrb[0].mxu0
    %v1670 = vadd.f32 %v1484, %v1669
    %v1671 = vpop.f32.mrb[0].mxu0
    %v1672 = vadd.f32 %v1484, %v1671
    %1673 = vmatprep.mubr.f32.mxu0 0.0
    %1674 = vmatmul.mubr.f32.gmra.mrb[0].mxu0 %v1503
    %v1675 = vpop.f32.mrb[0].mxu0
    %v1676 = vadd.f32 %v1489, %v1675
    %v1677 = vpop.f32.mrb[0].mxu0
    %v1678 = vadd.f32 %v1489, %v1677
    %1679 = vmatprep.mubr.f32.mxu0 0.0
    %1680 = vmatmul.mubr.f32.gmra.mrb[0].mxu0 %v1506
    %v1681 = vpop.f32.mrb[0].mxu0
    %v1682 = vadd.f32 %v1494, %v1681
    %v1683 = vpop.f32.mrb[0].mxu0
    %v1684 = vadd.f32 %v1494, %v1683
    %1685 = vdwg.mxu0
    %1686 = vmatprep.subr.mxu0 %v1438
    %1687 = vmatpush1.msra.mxu0 %v1437
    %1688 = vmatprep.subr.mxu0 %v1446
    %1689 = vmatpush1.msra.mxu0 %v1445
    %1690 = vmatprep.subr.mxu0 %v1454
    %1691 = vmatpush1.msra.mxu0 %v1453
    %1692 = vmatprep.subr.mxu0 %v1462
    %1693 = vmatpush1.msra.mxu0 %v1461
    %1694 = vmatprep.subr.mxu0 %v1439
    %1695 = vmatpush1.msra.mxu0 %v1438
    %1696 = vmatprep.subr.mxu0 %v1447
    %1697 = vmatpush1.msra.mxu0 %v1446
    %1698 = vmatprep.subr.mxu0 %v1455
    %1699 = vmatpush1.msra.mxu0 %v1454
    %1700 = vmatprep.subr.mxu0 %v1463
    %1701 = vmatpush1.msra.mxu0 %v1462
    %1702 = vmatprep.subr.mxu0 %v1440
    %1703 = vmatpush1.msra.mxu0 %v1439
    %1704 = vmatprep.subr.mxu0 %v1448
    %1705 = vmatpush1.msra.mxu0 %v1447
    %1706 = vmatprep.subr.mxu0 %v1456
    %1707 = vmatpush1.msra.mxu0 %v1455
    %1708 = vmatprep.subr.mxu0 %v1464
    %1709 = vmatpush1.msra.mxu0 %v1463
    %1710 = vmatprep.subr.mxu0 0.0
    %1711 = vmatpush1.msra.mxu0 0.0
    %1712 = vmatprep.subr.mxu0 0.0
    %1713 = vmatpush1.msra.mxu0 0.0
    %1714 = vmatprep.subr.mxu0 0.0
    %1715 = vmatpush1.msra.mxu0 0.0
    %1716 = vmatprep.subr.mxu0 0.0
    %1717 = vmatpush1.msra.mxu0 0.0
    %1718 = vmatprep.subr.mxu0 0.0
    %1719 = vmatpush1.msra.mxu0 0.0
    %1720 = vmatprep.subr.mxu0 0.0
    %1721 = vmatpush1.msra.mxu0 0.0
    %1722 = vmatprep.subr.mxu0 0.0
    %1723 = vmatpush1.msra.mxu0 0.0
    %1724 = vmatprep.subr.mxu0 0.0
    %1725 = vmatpush1.msra.mxu0 0.0
    %1726 = vmatprep.subr.mxu0 0.0
    %1727 = vmatpush1.msra.mxu0 0.0
    %1728 = vmatprep.subr.mxu0 0.0
    %1729 = vmatpush1.msra.mxu0 0.0
    %1730 = vmatprep.subr.mxu0 0.0
    %1731 = vmatpush1.msra.mxu0 0.0
    %1732 = vmatprep.subr.mxu0 0.0
    %1733 = vmatpush1.msra.mxu0 0.0
    %1734 = vmatprep.subr.mxu0 0.0
    %1735 = vmatpush1.msra.mxu0 0.0
    %1736 = vmatprep.subr.mxu0 0.0
    %1737 = vmatpush1.msra.mxu0 0.0
    %1738 = vmatprep.subr.mxu0 0.0
    %1739 = vmatpush1.msra.mxu0 0.0
    %1740 = vmatprep.subr.mxu0 0.0
    %1741 = vmatpush1.msra.mxu0 0.0
    %1742 = vmatprep.subr.mxu0 0.0
    %1743 = vmatpush1.msra.mxu0 0.0
    %1744 = vmatprep.subr.mxu0 0.0
    %1745 = vmatpush1.msra.mxu0 0.0
    %1746 = vmatprep.subr.mxu0 0.0
    %1747 = vmatpush1.msra.mxu0 0.0
    %1748 = vmatprep.subr.mxu0 0.0
    %1749 = vmatpush1.msra.mxu0 0.0
    %1750 = vmatprep.mubr.f32.mxu0 0.0
    %1751 = vmatmul.mubr.f32.gmra.mrb[0].mxu0 %v1497
    %v1752 = vpop.f32.mrb[0].mxu0
    %v1753 = vadd.f32 %v1479, %v1752
    %v1754 = vpop.f32.mrb[0].mxu0
    %v1755 = vadd.f32 %v1479, %v1754
    %1756 = vmatprep.mubr.f32.mxu0 0.0
    %1757 = vmatmul.mubr.f32.gmra.mrb[0].mxu0 %v1500
    %v1758 = vpop.f32.mrb[0].mxu0
    %v1759 = vadd.f32 %v1484, %v1758
    %v1760 = vpop.f32.mrb[0].mxu0
    %v1761 = vadd.f32 %v1484, %v1760
    %1762 = vmatprep.mubr.f32.mxu0 0.0
    %1763 = vmatmul.mubr.f32.gmra.mrb[0].mxu0 %v1503
    %v1764 = vpop.f32.mrb[0].mxu0
    %v1765 = vadd.f32 %v1489, %v1764
    %v1766 = vpop.f32.mrb[0].mxu0
    %v1767 = vadd.f32 %v1489, %v1766
    %1768 = vmatprep.mubr.f32.mxu0 0.0
    %1769 = vmatmul.mubr.f32.gmra.mrb[0].mxu0 %v1506
    %v1770 = vpop.f32.mrb[0].mxu0
    %v1771 = vadd.f32 %v1494, %v1770
    %v1772 = vpop.f32.mrb[0].mxu0
    %v1773 = vadd.f32 %v1494, %v1772
    %1774 = vdwg.mxu0
    %1775 = vmatprep.subr.mxu0 %v1440
    %1776 = vmatpush1.msra.mxu0 %v1439
    %1777 = vmatprep.subr.mxu0 %v1448
    %1778 = vmatpush1.msra.mxu0 %v1447
    %1779 = vmatprep.subr.mxu0 %v1456
    %1780 = vmatpush1.msra.mxu0 %v1455
    %1781 = vmatprep.subr.mxu0 %v1464
    %1782 = vmatpush1.msra.mxu0 %v1463
    %1783 = vmatprep.subr.mxu0 %v1441
    %1784 = vmatpush1.msra.mxu0 %v1440
    %1785 = vmatprep.subr.mxu0 %v1449
    %1786 = vmatpush1.msra.mxu0 %v1448
    %1787 = vmatprep.subr.mxu0 %v1457
    %1788 = vmatpush1.msra.mxu0 %v1456
    %1789 = vmatprep.subr.mxu0 %v1465
    %1790 = vmatpush1.msra.mxu0 %v1464
    %1791 = vmatprep.subr.mxu0 0.0
    %1792 = vmatpush1.msra.mxu0 %v1441
    %1793 = vmatprep.subr.mxu0 0.0
    %1794 = vmatpush1.msra.mxu0 %v1449
    %1795 = vmatprep.subr.mxu0 0.0
    %1796 = vmatpush1.msra.mxu0 %v1457
    %1797 = vmatprep.subr.mxu0 0.0
    %1798 = vmatpush1.msra.mxu0 %v1465
    %1799 = vmatprep.subr.mxu0 0.0
    %1800 = vmatpush1.msra.mxu0 0.0
    %1801 = vmatprep.subr.mxu0 0.0
    %1802 = vmatpush1.msra.mxu0 0.0
    %1803 = vmatprep.subr.mxu0 0.0
    %1804 = vmatpush1.msra.mxu0 0.0
    %1805 = vmatprep.subr.mxu0 0.0
    %1806 = vmatpush1.msra.mxu0 0.0
    %1807 = vmatprep.subr.mxu0 0.0
    %1808 = vmatpush1.msra.mxu0 0.0
    %1809 = vmatprep.subr.mxu0 0.0
    %1810 = vmatpush1.msra.mxu0 0.0
    %1811 = vmatprep.subr.mxu0 0.0
    %1812 = vmatpush1.msra.mxu0 0.0
    %1813 = vmatprep.subr.mxu0 0.0
    %1814 = vmatpush1.msra.mxu0 0.0
    %1815 = vmatprep.subr.mxu0 0.0
    %1816 = vmatpush1.msra.mxu0 0.0
    %1817 = vmatprep.subr.mxu0 0.0
    %1818 = vmatpush1.msra.mxu0 0.0
    %1819 = vmatprep.subr.mxu0 0.0
    %1820 = vmatpush1.msra.mxu0 0.0
    %1821 = vmatprep.subr.mxu0 0.0
    %1822 = vmatpush1.msra.mxu0 0.0
    %1823 = vmatprep.subr.mxu0 0.0
    %1824 = vmatpush1.msra.mxu0 0.0
    %1825 = vmatprep.subr.mxu0 0.0
    %1826 = vmatpush1.msra.mxu0 0.0
    %1827 = vmatprep.subr.mxu0 0.0
    %1828 = vmatpush1.msra.mxu0 0.0
    %1829 = vmatprep.subr.mxu0 0.0
    %1830 = vmatpush1.msra.mxu0 0.0
    %1831 = vmatprep.subr.mxu0 0.0
    %1832 = vmatpush1.msra.mxu0 0.0
    %1833 = vmatprep.subr.mxu0 0.0
    %1834 = vmatpush1.msra.mxu0 0.0
    %1835 = vmatprep.subr.mxu0 0.0
    %1836 = vmatpush1.msra.mxu0 0.0
    %1837 = vmatprep.subr.mxu0 0.0
    %1838 = vmatpush1.msra.mxu0 0.0
    %1839 = vmatprep.mubr.f32.mxu0 0.0
    %1840 = vmatmul.mubr.f32.gmra.mrb[0].mxu0 %v1497
    %v1841 = vpop.f32.mrb[0].mxu0
    %v1842 = vadd.f32 %v1479, %v1841
    %v1843 = vpop.f32.mrb[0].mxu0
    %v1844 = vadd.f32 %v1479, %v1843
    %1845 = vmatprep.mubr.f32.mxu0 0.0
    %1846 = vmatmul.mubr.f32.gmra.mrb[0].mxu0 %v1500
    %v1847 = vpop.f32.mrb[0].mxu0
    %v1848 = vadd.f32 %v1484, %v1847
    %v1849 = vpop.f32.mrb[0].mxu0
    %v1850 = vadd.f32 %v1484, %v1849
    %1851 = vmatprep.mubr.f32.mxu0 0.0
    %1852 = vmatmul.mubr.f32.gmra.mrb[0].mxu0 %v1503
    %v1853 = vpop.f32.mrb[0].mxu0
    %v1854 = vadd.f32 %v1489, %v1853
    %v1855 = vpop.f32.mrb[0].mxu0
    %v1856 = vadd.f32 %v1489, %v1855
    %1857 = vmatprep.mubr.f32.mxu0 0.0
    %1858 = vmatmul.mubr.f32.gmra.mrb[0].mxu0 %v1506
    %v1859 = vpop.f32.mrb[0].mxu0
    %v1860 = vadd.f32 %v1494, %v1859
    %v1861 = vpop.f32.mrb[0].mxu0
    %v1862 = vadd.f32 %v1494, %v1861
    %1863 = vdwg.mxu0
    %v1864 = vmax.f32 %v1575, 0.0
    %v1865 = vmax.f32 %v1577, 0.0
    %v1866 = vmax.f32 %v1664, 0.0
    %v1867 = vmax.f32 %v1666, 0.0
    %v1868 = vmax.f32 %v1753, 0.0
    %v1869 = vmax.f32 %v1755, 0.0
    %v1870 = vmax.f32 %v1842, 0.0
    %v1871 = vmax.f32 %v1844, 0.0
    %v1872 = vmax.f32 %v1581, 0.0
    %v1873 = vmax.f32 %v1583, 0.0
    %v1874 = vmax.f32 %v1670, 0.0
    %v1875 = vmax.f32 %v1672, 0.0
    %v1876 = vmax.f32 %v1759, 0.0
    %v1877 = vmax.f32 %v1761, 0.0
    %v1878 = vmax.f32 %v1848, 0.0
    %v1879 = vmax.f32 %v1850, 0.0
    %v1880 = vmax.f32 %v1587, 0.0
    %v1881 = vmax.f32 %v1589, 0.0
    %v1882 = vmax.f32 %v1676, 0.0
    %v1883 = vmax.f32 %v1678, 0.0
    %v1884 = vmax.f32 %v1765, 0.0
    %v1885 = vmax.f32 %v1767, 0.0
    %v1886 = vmax.f32 %v1854, 0.0
    %v1887 = vmax.f32 %v1856, 0.0
    %v1888 = vmax.f32 %v1593, 0.0
    %v1889 = vmax.f32 %v1595, 0.0
    %v1890 = vmax.f32 %v1682, 0.0
    %v1891 = vmax.f32 %v1684, 0.0
    %v1892 = vmax.f32 %v1771, 0.0
    %v1893 = vmax.f32 %v1773, 0.0
    %v1894 = vmax.f32 %v1860, 0.0
    %v1895 = vmax.f32 %v1862, 0.0
    %vm1896 = vcmp.eq.s32.totalorder %v18, 0
    %v1897 = vsel %vm1896, 1, 0
    %v1898 = vlaneseq
    %v1899 = vshrl.u32 %v1898, 7
    %v1900 = vsub.s32 0, %v1899
    %v1901 = vrot.slane %v1897, %v1900
    %v1902 = vlaneseq
    %v1903 = vshrl.u32 %v1902, 7
    %v1904 = vsub.s32 1, %v1903
    %v1905 = vrot.slane %v1897, %v1904
    %v1906 = vlaneseq
    %v1907 = vshrl.u32 %v1906, 7
    %v1908 = vsub.s32 2, %v1907
    %v1909 = vrot.slane %v1897, %v1908
    %v1910 = vlaneseq
    %v1911 = vshrl.u32 %v1910, 7
    %v1912 = vsub.s32 3, %v1911
    %v1913 = vrot.slane %v1897, %v1912
    %v1914 = vlaneseq
    %v1915 = vshrl.u32 %v1914, 7
    %v1916 = vsub.s32 4, %v1915
    %v1917 = vrot.slane %v1897, %v1916
    %v1918 = vlaneseq
    %v1919 = vshrl.u32 %v1918, 7
    %v1920 = vsub.s32 5, %v1919
    %v1921 = vrot.slane %v1897, %v1920
    %v1922 = vlaneseq
    %v1923 = vshrl.u32 %v1922, 7
    %v1924 = vsub.s32 6, %v1923
    %v1925 = vrot.slane %v1897, %v1924
    %v1926 = vlaneseq
    %v1927 = vshrl.u32 %v1926, 7
    %v1928 = vsub.s32 7, %v1927
    %v1929 = vrot.slane %v1897, %v1928
    %vm1930 = vcmp.eq.s32.totalorder %v1901, 1
    %vm1931 = vcmp.eq.s32.totalorder %v1905, 1
    %vm1932 = vcmp.eq.s32.totalorder %v1909, 1
    %vm1933 = vcmp.eq.s32.totalorder %v1913, 1
    %vm1934 = vcmp.eq.s32.totalorder %v1917, 1
    %vm1935 = vcmp.eq.s32.totalorder %v1921, 1
    %vm1936 = vcmp.eq.s32.totalorder %v1925, 1
    %vm1937 = vcmp.eq.s32.totalorder %v1929, 1
    %v1938 = vsel %vm1930, -inf, %v1864
    %v1939 = vsel %vm1931, -inf, %v1865
    %v1940 = vsel %vm1932, -inf, %v1866
    %v1941 = vsel %vm1933, -inf, %v1867
    %v1942 = vsel %vm1934, -inf, %v1868
    %v1943 = vsel %vm1935, -inf, %v1869
    %v1944 = vsel %vm1936, -inf, %v1870
    %v1945 = vsel %vm1937, -inf, %v1871
    %v1946 = vsel %vm1930, -inf, %v1872
    %v1947 = vsel %vm1931, -inf, %v1873
    %v1948 = vsel %vm1932, -inf, %v1874
    %v1949 = vsel %vm1933, -inf, %v1875
    %v1950 = vsel %vm1934, -inf, %v1876
    %v1951 = vsel %vm1935, -inf, %v1877
    %v1952 = vsel %vm1936, -inf, %v1878
    %v1953 = vsel %vm1937, -inf, %v1879
    %v1954 = vsel %vm1930, -inf, %v1880
    %v1955 = vsel %vm1931, -inf, %v1881
    %v1956 = vsel %vm1932, -inf, %v1882
    %v1957 = vsel %vm1933, -inf, %v1883
    %v1958 = vsel %vm1934, -inf, %v1884
    %v1959 = vsel %vm1935, -inf, %v1885
    %v1960 = vsel %vm1936, -inf, %v1886
    %v1961 = vsel %vm1937, -inf, %v1887
    %v1962 = vsel %vm1930, -inf, %v1888
    %v1963 = vsel %vm1931, -inf, %v1889
    %v1964 = vsel %vm1932, -inf, %v1890
    %v1965 = vsel %vm1933, -inf, %v1891
    %v1966 = vsel %vm1934, -inf, %v1892
    %v1967 = vsel %vm1935, -inf, %v1893
    %v1968 = vsel %vm1936, -inf, %v1894
    %v1969 = vsel %vm1937, -inf, %v1895
    %v1970 = vmax.f32 %v1938, %v1939
    %v1971 = vmax.f32 %v1946, %v1947
    %v1972 = vmax.f32 %v1954, %v1955
    %v1973 = vmax.f32 %v1962, %v1963
    %v1974 = vmax.f32 %v1970, %v1940
    %v1975 = vmax.f32 %v1971, %v1948
    %v1976 = vmax.f32 %v1972, %v1956
    %v1977 = vmax.f32 %v1973, %v1964
    %v1978 = vmax.f32 %v1974, %v1941
    %v1979 = vmax.f32 %v1975, %v1949
    %v1980 = vmax.f32 %v1976, %v1957
    %v1981 = vmax.f32 %v1977, %v1965
    %v1982 = vmax.f32 %v1978, %v1942
    %v1983 = vmax.f32 %v1979, %v1950
    %v1984 = vmax.f32 %v1980, %v1958
    %v1985 = vmax.f32 %v1981, %v1966
    %v1986 = vmax.f32 %v1982, %v1943
    %v1987 = vmax.f32 %v1983, %v1951
    %v1988 = vmax.f32 %v1984, %v1959
    %v1989 = vmax.f32 %v1985, %v1967
    %v1990 = vmax.f32 %v1986, %v1944
    %v1991 = vmax.f32 %v1987, %v1952
    %v1992 = vmax.f32 %v1988, %v1960
    %v1993 = vmax.f32 %v1989, %v1968
    %v1994 = vmax.f32 %v1990, %v1945
    %v1995 = vmax.f32 %v1991, %v1953
    %v1996 = vmax.f32 %v1992, %v1961
    %v1997 = vmax.f32 %v1993, %v1969
    %1998 = vst [vmem:[#allocation2] sm:$0xff] %v1994
    %1999 = vst [vmem:[#allocation2 + $0x8] sm:$0xff] %v1995
    %2000 = vst [vmem:[#allocation2 + $0x10] sm:$0xff] %v1996
    %2001 = vst [vmem:[#allocation2 + $0x18] sm:$0xff] %v1997
    // Predicated region
    $region18: #{tpu_custom_call.1} parent=1 // pred_check
      _
    $region19: #{tpu_custom_call.1} parent=1 // pred_check_branch
      %2003 = sbr.rel (0) target = $region21
    $region20: #{tpu_custom_call.1} parent=1 // pred_region
      %s2005 = ssub.s32 512, 512
      %2006 = vsyncadd [#allocation3], %s2005
      %s2007 = sshll.u32 [#allocation2], 4
      %s2008 = int_to_ptr.vmem [resolvable:$true] %s2007
      %2013 = dma.vmem_to_hbm [thread:$0]  %s2008, 512, %s4, [#allocation3], 128, 128, 8
    $region21: #{tpu_custom_call.1} parent=1 // pred_fallthru
      _
    // Predicated region
    $region22: #{tpu_custom_call.1} parent=1 // pred_check
      _
    $region23: #{tpu_custom_call.1} parent=1 // pred_check_branch
      %2015 = sbr.rel (0) target = $region25
    $region24: #{tpu_custom_call.1} parent=1 // pred_region
      %2016 = dma.done [#allocation3], 512
    $region25: #{tpu_custom_call.1} parent=1 // pred_fallthru
      _
    %2017 = vsyncpa [#allocation3], 1

</llo_original>
